<compile_context>
chip_gen: v7x
topology: tpu7x:2x2x1
jax: 0.10.0
libtpu: 0.0.40
codegen_flags: <defaults>
</compile_context>

<pallas_src>
import functools

import jax
import jax.numpy as jnp
from jax import lax
from jax.experimental import pallas as pl
from jax.experimental.pallas import tpu as pltpu

ORIGIN_SHAPE = 1024


def _bilinear_matrix(in_size, out_size):
    """(out_size, in_size) interpolation matrix, bilinear, align_corners=True."""
    if out_size == 1:
        return jnp.zeros((1, in_size), jnp.float32).at[0, 0].set(1.0)
    pos = jnp.arange(out_size, dtype=jnp.float32) * (in_size - 1) / (out_size - 1)
    i0 = jnp.clip(jnp.floor(pos).astype(jnp.int32), 0, in_size - 1)
    i1 = jnp.clip(i0 + 1, 0, in_size - 1)
    frac = pos - i0.astype(jnp.float32)
    rows = jnp.arange(out_size)
    m = jnp.zeros((out_size, in_size), jnp.float32)
    m = m.at[rows, i0].add(1.0 - frac)
    m = m.at[rows, i1].add(frac)
    return m


def _band(n, d):
    """B[a, b] = 1.0 if a == b + d else 0.0 (zero-padded shift matrix)."""
    a = jnp.arange(n)[:, None]
    b = jnp.arange(n)[None, :]
    return (a == b + d).astype(jnp.float32)


def _t2c_kernel(tx_ref, ty_ref,                     # scalar prefetch (SMEM), shape (B,)
                x_ref, wr3_ref, wct_ref, m_ref, bias_ref, cell_ref,
                out_ref, *, C, H, W, Ho, Wo, L):
    b = pl.program_id(0)
    S = 2 * L
    CW = C * W

    tx = tx_ref[b]                                   # indexes the H (row) axis
    ty = ty_ref[b]                                   # indexes the W (col) axis

    # ---- data-dependent one-hot crop selectors (ROI rows / cols of the upsample) ----
    rsel = (lax.broadcasted_iota(jnp.int32, (S, Ho), 1)
            == lax.broadcasted_iota(jnp.int32, (S, Ho), 0) + (tx - L)
            ).astype(jnp.float32)                    # (S, Ho)
    cselT = (lax.broadcasted_iota(jnp.int32, (Wo, S), 0)
             == lax.broadcasted_iota(jnp.int32, (Wo, S), 1) + (ty - L)
             ).astype(jnp.float32)                   # (Wo, S)
    wct = jnp.dot(wct_ref[...], cselT,
                  preferred_element_type=jnp.float32)                       # (W, S)

    x2d = x_ref[0]                                   # (H, C*W) f32

    # ---- row-crop-upsample fused with the conv's dy taps ----
    #   rows = sum_dy (rsel @ Wr3[dy] @ x) @ M[dy]  + bias
    # (the dy row shift of the 3x3 conv is folded into the static Wr3[dy]).
    acc = None
    for t in range(3):                               # dy = t - 1
        wr_t = jnp.dot(rsel, wr3_ref[t],
                       preferred_element_type=jnp.float32)                  # (S, H)
        z_t = jnp.dot(wr_t, x2d, preferred_element_type=jnp.float32)        # (S, C*W)
        term = jnp.dot(z_t.astype(jnp.bfloat16), m_ref[t],
                       preferred_element_type=jnp.float32)                  # (S, C*W)
        acc = term if acc is None else acc + term
    rows = acc + bias_ref[...]                       # + per-channel bias (rows of Wr sum to 1)

    # ---- column-crop-upsample per channel, lane-packed, single dense store ----
    pieces = []
    for c in range(C):
        pieces.append(jnp.dot(rows[:, c * W:(c + 1) * W], wct,
                              preferred_element_type=jnp.float32))          # (S, S)
    roi = jnp.concatenate(pieces, axis=1)            # (S, C*S)
    out_ref[0] = roi + cell_ref[0]


def _run_level(x2d, Wr3, WcT, M3, bias_row, cell2d, tx, ty,
               *, C, H, W, Ho, Wo, L):
    B = x2d.shape[0]
    S = 2 * L
    kern = functools.partial(_t2c_kernel, C=C, H=H, W=W, Ho=Ho, Wo=Wo, L=L)
    return pl.pallas_call(
        kern,
        out_shape=jax.ShapeDtypeStruct((B, S, C * S), jnp.float32),
        grid_spec=pltpu.PrefetchScalarGridSpec(
            num_scalar_prefetch=2,
            grid=(B,),
            in_specs=[
                pl.BlockSpec((1, H, C * W), lambda b, tx, ty: (b, 0, 0)),
                pl.BlockSpec((3, Ho, H), lambda b, tx, ty: (0, 0, 0)),
                pl.BlockSpec((W, Wo), lambda b, tx, ty: (0, 0)),
                pl.BlockSpec((3, C * W, C * W), lambda b, tx, ty: (0, 0, 0)),
                pl.BlockSpec((1, C * W), lambda b, tx, ty: (0, 0)),
                pl.BlockSpec((1, S, C * S), lambda b, tx, ty: (b, 0, 0)),
            ],
            out_specs=pl.BlockSpec((1, S, C * S), lambda b, tx, ty: (b, 0, 0)),
        ),
        compiler_params=pltpu.CompilerParams(
            dimension_semantics=("parallel",)),
    )(tx, ty, x2d, Wr3, WcT, M3, bias_row, cell2d)


@functools.partial(jax.jit,
                   static_argnames=("C", "H", "W", "Ho", "Wo", "L", "origin_shape"))
def _level_forward(tissue, cell, x, y, Wr3, WcT, M3, bias_row,
                   *, C, H, W, Ho, Wo, L, origin_shape):
    B = tissue.shape[0]
    S = 2 * L
    # .long() truncation toward zero (coordinates are positive here)
    tx = (x * Wo / origin_shape).astype(jnp.int32)
    ty = (y * Wo / origin_shape).astype(jnp.int32)
    x2d = tissue.transpose(0, 2, 1, 3).reshape(B, H, C * W)       # lane-major (H, C*W)
    cell2d = cell.transpose(0, 2, 1, 3).reshape(B, S, C * S)
    out2d = _run_level(x2d, Wr3, WcT, M3, bias_row, cell2d, tx, ty,
                       C=C, H=H, W=W, Ho=Ho, Wo=Wo, L=L)
    return out2d.reshape(B, S, C, S).transpose(0, 2, 1, 3)


class Tissue2Cell:
    """JAX/Pallas port of the PyTorch Tissue2Cell module."""

    def __init__(self, feature_channels, feature_depth, scale_factor, key):
        self.feature_depth = feature_depth + 1
        self.scale_factor = scale_factor
        self.origin_shape = ORIGIN_SHAPE
        if self.feature_depth == 1:
            feature_channels = [feature_channels]
        self.weights = []
        self.biases = []
        for i in range(self.feature_depth):
            key, kw, kb = jax.random.split(key, 3)
            C = feature_channels[i]
            bound = 1.0 / (9.0 * C) ** 0.5           # PyTorch Conv2d default init bound
            self.weights.append(
                jax.random.uniform(kw, (C, C, 3, 3), jnp.float32, -bound, bound))
            self.biases.append(
                jax.random.uniform(kb, (C,), jnp.float32, -bound, bound))
        self._structs = {}                            # cache: (level, C, H, W) -> matrices

    def _get_structs(self, i, C, H, W, Ho, Wo):
        key = (i, C, H, W)
        if key not in self._structs:
            w, bias = self.weights[i], self.biases[i]
            # M3[dy][ci*W + w', c*W + w] = w[c, ci, dy+1, (w'-w)+1]  (dx taps + channel mix)
            M3 = jnp.stack([
                sum(jnp.kron(w[:, :, dy + 1, dx + 1].T, _band(W, dx))
                    for dx in (-1, 0, 1))
                for dy in (-1, 0, 1)]).astype(jnp.bfloat16)          # (3, C*W, C*W)
            Wr = _bilinear_matrix(H, Ho)                             # (Ho, H)
            # Wr3[dy] = Wr @ band(-dy): the conv's row (dy) shift folded into the
            # row-upsample operator, so the kernel needs no in-kernel row shifts.
            Wr3 = jnp.stack([Wr @ _band(H, -dy) for dy in (-1, 0, 1)])  # (3, Ho, H)
            WcT = _bilinear_matrix(W, Wo).T                          # (W, Wo)
            bias_row = jnp.repeat(bias, W)[None, :]                  # (1, C*W)
            self._structs[key] = (Wr3, WcT, M3, bias_row)
        return self._structs[key]

    def __call__(self, tissue_features, cell_features, loc):
        single = self.feature_depth == 1
        if single:
            tissue_features = [tissue_features]
            cell_features = [cell_features]
        x = loc[:, 1]
        y = loc[:, 0]
        out = []
        for i in range(self.feature_depth):
            out.append(self._forward_level(i, tissue_features[i], cell_features[i], x, y))
        return out[0] if single else out

    def _forward_level(self, i, tissue, cell, x, y):
        B, C, H, W = tissue.shape
        Ho = int(H * self.scale_factor)
        Wo = int(W * self.scale_factor)
        L = int(128 * Wo / self.origin_shape)
        Wr3, WcT, M3, bias_row = self._get_structs(i, C, H, W, Ho, Wo)
        return _level_forward(tissue, cell, x, y, Wr3, WcT, M3, bias_row,
                              C=C, H=H, W=W, Ho=Ho, Wo=Wo, L=L,
                              origin_shape=self.origin_shape)


def _reference(model, tissue_features, cell_features, loc):
    """Pure-JAX reference matching the PyTorch forward."""
    single = model.feature_depth == 1
    tf = [tissue_features] if single else tissue_features
    cf = [cell_features] if single else cell_features
    x = loc[:, 1]
    y = loc[:, 0]
    outs = []
    for i in range(model.feature_depth):
        w, bias = model.weights[i], model.biases[i]
        t = tf[i]
        B, C, H, W = t.shape
        origin = lax.conv_general_dilated(
            t, w, window_strides=(1, 1), padding=((1, 1), (1, 1)),
            dimension_numbers=("NCHW", "OIHW", "NCHW")) + bias[None, :, None, None]
        Ho = int(H * model.scale_factor)
        Wo = int(W * model.scale_factor)
        Wr = _bilinear_matrix(H, Ho)
        Wc = _bilinear_matrix(W, Wo)
        up = jnp.einsum("oh,bchw->bcow", Wr, origin)
        up = jnp.einsum("bcow,pw->bcop", up, Wc)
        tx = (x * Wo / model.origin_shape).astype(jnp.int32)
        ty = (y * Wo / model.origin_shape).astype(jnp.int32)
        L = int(128 * Wo / model.origin_shape)
        rois = []
        for j in range(B):
            rois.append(lax.dynamic_slice(
                up[j], (jnp.int32(0), tx[j] - L, ty[j] - L), (C, 2 * L, 2 * L)))
        outs.append(jnp.stack(rois, axis=0) + cf[i])
    return outs[0] if single else outs


if __name__ == "__main__":
    B = 2
    feature_channels = [4, 8]
    feature_depth = 1          # module builds feature_depth + 1 = 2 conv levels
    scale_factor = 2

    root = jax.random.PRNGKey(0)
    kmodel, k1, k2, k3, k4 = jax.random.split(root, 5)

    model = Tissue2Cell(feature_channels, feature_depth, scale_factor, key=kmodel)

    tissue_features = [
        jax.random.normal(k1, (B, 4, 16, 16), jnp.float32),   # level 0
        jax.random.normal(k2, (B, 8, 32, 32), jnp.float32),   # level 1
    ]
    # ROI side = 2 * int(128 * (W*scale) / 1024)  ->  8 and 16
    cell_features = [
        jax.random.normal(k3, (B, 4, 8, 8), jnp.float32),
        jax.random.normal(k4, (B, 8, 16, 16), jnp.float32),
    ]
    # loc[:, 0] = y, loc[:, 1] = x (chosen so the ROI stays in-bounds, as assumed by the module)
    loc = jnp.array([[400.0, 320.0], [672.0, 544.0]], jnp.float32)

    out = model(tissue_features, cell_features, loc)
    out = jax.block_until_ready(out)

    ref = _reference(model, tissue_features, cell_features, loc)
    for o, r in zip(out, ref):
        assert o.shape == r.shape, (o.shape, r.shape)
        assert bool(jnp.allclose(o, r, atol=1e-2, rtol=1e-2)), \
            float(jnp.max(jnp.abs(o - r)))

    print("KERNEL_OK")
</pallas_src>

<mosaic_0001>
module attributes {stable_mosaic.version = 11 : i64} {
  func.func @_t2c_kernel(%arg0: i32, %arg1: memref<2xi32, #tpu.memory_space<smem>>, %arg2: memref<2xi32, #tpu.memory_space<smem>>, %arg3: memref<1x16x64xf32, #tpu.memory_space<vmem>>, %arg4: memref<3x32x16xf32, #tpu.memory_space<vmem>>, %arg5: memref<16x32xf32, #tpu.memory_space<vmem>>, %arg6: memref<3x64x64xbf16, #tpu.memory_space<vmem>>, %arg7: memref<1x64xf32, #tpu.memory_space<vmem>>, %arg8: memref<1x8x32xf32, #tpu.memory_space<vmem>>, %arg9: memref<1x8x32xf32, #tpu.memory_space<vmem>>) attributes {dimension_semantics = [#tpu.dimension_semantics<parallel>], iteration_bounds = array<i64: 2>, scalar_prefetch = 2 : i64, scratch_operands = 0 : i64, tpu.core_type = #tpu.core_type<tc>, window_params = [{transform_indices = @transform_0, window_bounds = array<i64: 1, 16, 64>}, {pipeline_mode = #tpu.pipeline_mode<synchronous>, transform_indices = @transform_1, window_bounds = array<i64: 3, 32, 16>}, {pipeline_mode = #tpu.pipeline_mode<synchronous>, transform_indices = @transform_2, window_bounds = array<i64: 16, 32>}, {pipeline_mode = #tpu.pipeline_mode<synchronous>, transform_indices = @transform_3, window_bounds = array<i64: 3, 64, 64>}, {pipeline_mode = #tpu.pipeline_mode<synchronous>, transform_indices = @transform_4, window_bounds = array<i64: 1, 64>}, {transform_indices = @transform_5, window_bounds = array<i64: 1, 8, 32>}, {transform_indices = @transform_6, window_bounds = array<i64: 1, 8, 32>}]} {
    %0 = arith.index_cast %arg0 : i32 to index
    %1 = memref.load %arg1[%0] : memref<2xi32, #tpu.memory_space<smem>>
    %2 = arith.index_cast %arg0 : i32 to index
    %3 = memref.load %arg2[%2] : memref<2xi32, #tpu.memory_space<smem>>
    %4 = tpu.iota {dimensions = array<i32: 1>} : vector<8x32xi32>
    %5 = tpu.iota {dimensions = array<i32: 0>} : vector<8x32xi32>
    %c4_i32 = arith.constant 4 : i32
    %6 = arith.subi %1, %c4_i32 : i32
    %7 = vector.broadcast %6 : i32 to vector<8x32xi32>
    %8 = arith.addi %5, %7 : vector<8x32xi32>
    %9 = arith.cmpi eq, %4, %8 : vector<8x32xi32>
    %10 = arith.extui %9 : vector<8x32xi1> to vector<8x32xi32>
    %11 = arith.sitofp %10 : vector<8x32xi32> to vector<8x32xf32>
    %12 = tpu.iota {dimensions = array<i32: 0>} : vector<32x8xi32>
    %13 = tpu.iota {dimensions = array<i32: 1>} : vector<32x8xi32>
    %c4_i32_0 = arith.constant 4 : i32
    %14 = arith.subi %3, %c4_i32_0 : i32
    %15 = vector.broadcast %14 : i32 to vector<32x8xi32>
    %16 = arith.addi %13, %15 : vector<32x8xi32>
    %17 = arith.cmpi eq, %12, %16 : vector<32x8xi32>
    %18 = arith.extui %17 : vector<32x8xi1> to vector<32x8xi32>
    %19 = arith.sitofp %18 : vector<32x8xi32> to vector<32x8xf32>
    %c0 = arith.constant 0 : index
    %c0_1 = arith.constant 0 : index
    %20 = vector.load %arg5[%c0, %c0_1] : memref<16x32xf32, #tpu.memory_space<vmem>>, vector<16x32xf32>
    %cst = arith.constant dense<0.000000e+00> : vector<16x8xf32>
    %21 = tpu.matmul %20, %19, %cst {dimension_numbers = #tpu.dot_dimension_numbers<[1], [0], [0], [1], [0, 0, 1, 1], [], []>} : vector<16x32xf32>, vector<32x8xf32>, vector<16x8xf32> -> vector<16x8xf32>
    %c0_2 = arith.constant 0 : index
    %c0_3 = arith.constant 0 : index
    %c0_4 = arith.constant 0 : index
    %22 = vector.load %arg3[%c0_2, %c0_3, %c0_4] : memref<1x16x64xf32, #tpu.memory_space<vmem>>, vector<1x16x64xf32>
    %23 = vector.shape_cast %22 : vector<1x16x64xf32> to vector<16x64xf32>
    %c0_5 = arith.constant 0 : index
    %c0_6 = arith.constant 0 : index
    %c0_7 = arith.constant 0 : index
    %24 = vector.load %arg4[%c0_5, %c0_6, %c0_7] : memref<3x32x16xf32, #tpu.memory_space<vmem>>, vector<1x32x16xf32>
    %25 = vector.shape_cast %24 : vector<1x32x16xf32> to vector<32x16xf32>
    %cst_8 = arith.constant dense<0.000000e+00> : vector<8x16xf32>
    %26 = tpu.matmul %11, %25, %cst_8 {dimension_numbers = #tpu.dot_dimension_numbers<[1], [0], [0], [1], [0, 0, 1, 1], [], []>} : vector<8x32xf32>, vector<32x16xf32>, vector<8x16xf32> -> vector<8x16xf32>
    %cst_9 = arith.constant dense<0.000000e+00> : vector<8x64xf32>
    %27 = tpu.matmul %26, %23, %cst_9 {dimension_numbers = #tpu.dot_dimension_numbers<[1], [0], [0], [1], [0, 0, 1, 1], [], []>} : vector<8x16xf32>, vector<16x64xf32>, vector<8x64xf32> -> vector<8x64xf32>
    %28 = arith.truncf %27 : vector<8x64xf32> to vector<8x64xbf16>
    %c0_10 = arith.constant 0 : index
    %c0_11 = arith.constant 0 : index
    %c0_12 = arith.constant 0 : index
    %29 = vector.load %arg6[%c0_10, %c0_11, %c0_12] : memref<3x64x64xbf16, #tpu.memory_space<vmem>>, vector<1x64x64xbf16>
    %30 = vector.shape_cast %29 : vector<1x64x64xbf16> to vector<64x64xbf16>
    %cst_13 = arith.constant dense<0.000000e+00> : vector<8x64xf32>
    %31 = tpu.matmul %28, %30, %cst_13 {dimension_numbers = #tpu.dot_dimension_numbers<[1], [0], [0], [1], [0, 0, 1, 1], [], []>} : vector<8x64xbf16>, vector<64x64xbf16>, vector<8x64xf32> -> vector<8x64xf32>
    %c1 = arith.constant 1 : index
    %c0_14 = arith.constant 0 : index
    %c0_15 = arith.constant 0 : index
    %32 = vector.load %arg4[%c1, %c0_14, %c0_15] : memref<3x32x16xf32, #tpu.memory_space<vmem>>, vector<1x32x16xf32>
    %33 = vector.shape_cast %32 : vector<1x32x16xf32> to vector<32x16xf32>
    %cst_16 = arith.constant dense<0.000000e+00> : vector<8x16xf32>
    %34 = tpu.matmul %11, %33, %cst_16 {dimension_numbers = #tpu.dot_dimension_numbers<[1], [0], [0], [1], [0, 0, 1, 1], [], []>} : vector<8x32xf32>, vector<32x16xf32>, vector<8x16xf32> -> vector<8x16xf32>
    %cst_17 = arith.constant dense<0.000000e+00> : vector<8x64xf32>
    %35 = tpu.matmul %34, %23, %cst_17 {dimension_numbers = #tpu.dot_dimension_numbers<[1], [0], [0], [1], [0, 0, 1, 1], [], []>} : vector<8x16xf32>, vector<16x64xf32>, vector<8x64xf32> -> vector<8x64xf32>
    %36 = arith.truncf %35 : vector<8x64xf32> to vector<8x64xbf16>
    %c1_18 = arith.constant 1 : index
    %c0_19 = arith.constant 0 : index
    %c0_20 = arith.constant 0 : index
    %37 = vector.load %arg6[%c1_18, %c0_19, %c0_20] : memref<3x64x64xbf16, #tpu.memory_space<vmem>>, vector<1x64x64xbf16>
    %38 = vector.shape_cast %37 : vector<1x64x64xbf16> to vector<64x64xbf16>
    %cst_21 = arith.constant dense<0.000000e+00> : vector<8x64xf32>
    %39 = tpu.matmul %36, %38, %cst_21 {dimension_numbers = #tpu.dot_dimension_numbers<[1], [0], [0], [1], [0, 0, 1, 1], [], []>} : vector<8x64xbf16>, vector<64x64xbf16>, vector<8x64xf32> -> vector<8x64xf32>
    %40 = arith.addf %31, %39 : vector<8x64xf32>
    %c2 = arith.constant 2 : index
    %c0_22 = arith.constant 0 : index
    %c0_23 = arith.constant 0 : index
    %41 = vector.load %arg4[%c2, %c0_22, %c0_23] : memref<3x32x16xf32, #tpu.memory_space<vmem>>, vector<1x32x16xf32>
    %42 = vector.shape_cast %41 : vector<1x32x16xf32> to vector<32x16xf32>
    %cst_24 = arith.constant dense<0.000000e+00> : vector<8x16xf32>
    %43 = tpu.matmul %11, %42, %cst_24 {dimension_numbers = #tpu.dot_dimension_numbers<[1], [0], [0], [1], [0, 0, 1, 1], [], []>} : vector<8x32xf32>, vector<32x16xf32>, vector<8x16xf32> -> vector<8x16xf32>
    %cst_25 = arith.constant dense<0.000000e+00> : vector<8x64xf32>
    %44 = tpu.matmul %43, %23, %cst_25 {dimension_numbers = #tpu.dot_dimension_numbers<[1], [0], [0], [1], [0, 0, 1, 1], [], []>} : vector<8x16xf32>, vector<16x64xf32>, vector<8x64xf32> -> vector<8x64xf32>
    %45 = arith.truncf %44 : vector<8x64xf32> to vector<8x64xbf16>
    %c2_26 = arith.constant 2 : index
    %c0_27 = arith.constant 0 : index
    %c0_28 = arith.constant 0 : index
    %46 = vector.load %arg6[%c2_26, %c0_27, %c0_28] : memref<3x64x64xbf16, #tpu.memory_space<vmem>>, vector<1x64x64xbf16>
    %47 = vector.shape_cast %46 : vector<1x64x64xbf16> to vector<64x64xbf16>
    %cst_29 = arith.constant dense<0.000000e+00> : vector<8x64xf32>
    %48 = tpu.matmul %45, %47, %cst_29 {dimension_numbers = #tpu.dot_dimension_numbers<[1], [0], [0], [1], [0, 0, 1, 1], [], []>} : vector<8x64xbf16>, vector<64x64xbf16>, vector<8x64xf32> -> vector<8x64xf32>
    %49 = arith.addf %40, %48 : vector<8x64xf32>
    %c0_30 = arith.constant 0 : index
    %c0_31 = arith.constant 0 : index
    %50 = vector.load %arg7[%c0_30, %c0_31] : memref<1x64xf32, #tpu.memory_space<vmem>>, vector<1x64xf32>
    %51 = vector.broadcast %50 : vector<1x64xf32> to vector<8x64xf32>
    %52 = arith.addf %49, %51 : vector<8x64xf32>
    %53 = vector.extract_strided_slice %52 {offsets = [0, 0], sizes = [8, 16], strides = [1, 1]} : vector<8x64xf32> to vector<8x16xf32>
    %cst_32 = arith.constant dense<0.000000e+00> : vector<8x8xf32>
    %54 = tpu.matmul %53, %21, %cst_32 {dimension_numbers = #tpu.dot_dimension_numbers<[1], [0], [0], [1], [0, 0, 1, 1], [], []>} : vector<8x16xf32>, vector<16x8xf32>, vector<8x8xf32> -> vector<8x8xf32>
    %55 = vector.extract_strided_slice %52 {offsets = [0, 16], sizes = [8, 16], strides = [1, 1]} : vector<8x64xf32> to vector<8x16xf32>
    %cst_33 = arith.constant dense<0.000000e+00> : vector<8x8xf32>
    %56 = tpu.matmul %55, %21, %cst_33 {dimension_numbers = #tpu.dot_dimension_numbers<[1], [0], [0], [1], [0, 0, 1, 1], [], []>} : vector<8x16xf32>, vector<16x8xf32>, vector<8x8xf32> -> vector<8x8xf32>
    %57 = vector.extract_strided_slice %52 {offsets = [0, 32], sizes = [8, 16], strides = [1, 1]} : vector<8x64xf32> to vector<8x16xf32>
    %cst_34 = arith.constant dense<0.000000e+00> : vector<8x8xf32>
    %58 = tpu.matmul %57, %21, %cst_34 {dimension_numbers = #tpu.dot_dimension_numbers<[1], [0], [0], [1], [0, 0, 1, 1], [], []>} : vector<8x16xf32>, vector<16x8xf32>, vector<8x8xf32> -> vector<8x8xf32>
    %59 = vector.extract_strided_slice %52 {offsets = [0, 48], sizes = [8, 16], strides = [1, 1]} : vector<8x64xf32> to vector<8x16xf32>
    %cst_35 = arith.constant dense<0.000000e+00> : vector<8x8xf32>
    %60 = tpu.matmul %59, %21, %cst_35 {dimension_numbers = #tpu.dot_dimension_numbers<[1], [0], [0], [1], [0, 0, 1, 1], [], []>} : vector<8x16xf32>, vector<16x8xf32>, vector<8x8xf32> -> vector<8x8xf32>
    %61 = tpu.concatenate %54, %56, %58, %60 in 1 : vector<8x8xf32>, vector<8x8xf32>, vector<8x8xf32>, vector<8x8xf32> -> vector<8x32xf32>
    %c0_36 = arith.constant 0 : index
    %c0_37 = arith.constant 0 : index
    %c0_38 = arith.constant 0 : index
    %62 = vector.load %arg8[%c0_36, %c0_37, %c0_38] : memref<1x8x32xf32, #tpu.memory_space<vmem>>, vector<1x8x32xf32>
    %63 = vector.shape_cast %62 : vector<1x8x32xf32> to vector<8x32xf32>
    %64 = arith.addf %61, %63 : vector<8x32xf32>
    %c0_39 = arith.constant 0 : index
    %c0_40 = arith.constant 0 : index
    %c0_41 = arith.constant 0 : index
    %65 = vector.load %arg9[%c0_39, %c0_40, %c0_41] : memref<1x8x32xf32, #tpu.memory_space<vmem>>, vector<1x8x32xf32>
    %66 = vector.shape_cast %65 : vector<1x8x32xf32> to vector<8x32xf32>
    %67 = vector.shape_cast %64 : vector<8x32xf32> to vector<1x8x32xf32>
    tpu.vector_store %arg9[%c0_39, %c0_40, %c0_41], %67 {strides = array<i32>} : memref<1x8x32xf32, #tpu.memory_space<vmem>>, vector<1x8x32xf32>,
    return
  }
  func.func @transform_0(%arg0: i32, %arg1: memref<2xi32, #tpu.memory_space<smem>>, %arg2: memref<2xi32, #tpu.memory_space<smem>>) -> (i32, i32, i32) {
    %c0_i32 = arith.constant 0 : i32
    %c0_i32_0 = arith.constant 0 : i32
    %c0_i32_1 = arith.constant 0 : i32
    return %arg0, %c0_i32, %c0_i32_0 : i32, i32, i32
  }
  func.func @transform_1(%arg0: i32, %arg1: memref<2xi32, #tpu.memory_space<smem>>, %arg2: memref<2xi32, #tpu.memory_space<smem>>) -> (i32, i32, i32) {
    %c0_i32 = arith.constant 0 : i32
    %c0_i32_0 = arith.constant 0 : i32
    %c0_i32_1 = arith.constant 0 : i32
    %c0_i32_2 = arith.constant 0 : i32
    return %c0_i32, %c0_i32_0, %c0_i32_1 : i32, i32, i32
  }
  func.func @transform_2(%arg0: i32, %arg1: memref<2xi32, #tpu.memory_space<smem>>, %arg2: memref<2xi32, #tpu.memory_space<smem>>) -> (i32, i32) {
    %c0_i32 = arith.constant 0 : i32
    %c0_i32_0 = arith.constant 0 : i32
    %c0_i32_1 = arith.constant 0 : i32
    return %c0_i32, %c0_i32_0 : i32, i32
  }
  func.func @transform_3(%arg0: i32, %arg1: memref<2xi32, #tpu.memory_space<smem>>, %arg2: memref<2xi32, #tpu.memory_space<smem>>) -> (i32, i32, i32) {
    %c0_i32 = arith.constant 0 : i32
    %c0_i32_0 = arith.constant 0 : i32
    %c0_i32_1 = arith.constant 0 : i32
    %c0_i32_2 = arith.constant 0 : i32
    return %c0_i32, %c0_i32_0, %c0_i32_1 : i32, i32, i32
  }
  func.func @transform_4(%arg0: i32, %arg1: memref<2xi32, #tpu.memory_space<smem>>, %arg2: memref<2xi32, #tpu.memory_space<smem>>) -> (i32, i32) {
    %c0_i32 = arith.constant 0 : i32
    %c0_i32_0 = arith.constant 0 : i32
    %c0_i32_1 = arith.constant 0 : i32
    return %c0_i32, %c0_i32_0 : i32, i32
  }
  func.func @transform_5(%arg0: i32, %arg1: memref<2xi32, #tpu.memory_space<smem>>, %arg2: memref<2xi32, #tpu.memory_space<smem>>) -> (i32, i32, i32) {
    %c0_i32 = arith.constant 0 : i32
    %c0_i32_0 = arith.constant 0 : i32
    %c0_i32_1 = arith.constant 0 : i32
    return %arg0, %c0_i32, %c0_i32_0 : i32, i32, i32
  }
  func.func @transform_6(%arg0: i32, %arg1: memref<2xi32, #tpu.memory_space<smem>>, %arg2: memref<2xi32, #tpu.memory_space<smem>>) -> (i32, i32, i32) {
    %c0_i32 = arith.constant 0 : i32
    %c0_i32_0 = arith.constant 0 : i32
    %c0_i32_1 = arith.constant 0 : i32
    return %arg0, %c0_i32, %c0_i32_0 : i32, i32, i32
  }
}

</mosaic_0001>

<llo_original>
// kernel: _level_forward.1
$region0: #{_level_forward.1}
  #allocation0 [shape = 'u32[]', space=smem, size = 0x4, offset = 0x4, fixed_abs, tag = 'smem constant byte address 0x4 - core index']
  #allocation1 [shape = 'u32[144,128]{1,0:T(1,128)}', space=vmem, size = 0x12000, scoped, tag = 'internal scratch']
  #allocation2 [shape = 's32[1]{0}', space=sflag, size = 0x4, scoped, tag = 'scoped memory for _level_forward.1']
  #allocation3 [shape = 'u8[512]{0}', space=smem, size = 0x200, scoped, tag = 'prefetched SMEM operand 0']
  #allocation4 [shape = 'u8[512]{0}', space=smem, size = 0x200, scoped, tag = 'prefetched SMEM operand 1']
  %s0 = inlined_call_operand.vmem [shape: s32[2], index: 0, kind: input, shape index: {}]
  %s1 = inlined_call_operand.vmem [shape: s32[2], index: 1, kind: input, shape index: {}]
  %s2 = inlined_call_operand.vmem [shape: f32[2,16,64], index: 2, kind: input, shape index: {}]
  %s3 = inlined_call_operand.vmem [shape: f32[3,32,16], index: 3, kind: input, shape index: {}]
  %s4 = inlined_call_operand.vmem [shape: f32[16,32], index: 4, kind: input, shape index: {}]
  %s5 = inlined_call_operand.vmem [shape: bf16[3,64,64], index: 5, kind: input, shape index: {}]
  %s6 = inlined_call_operand.vmem [shape: f32[1,64], index: 6, kind: input, shape index: {}]
  %s7 = inlined_call_operand.vmem [shape: f32[2,8,32], index: 7, kind: input, shape index: {}]
  %s8 = inlined_call_operand.vmem [shape: f32[2,8,32], index: 8, kind: output, shape index: {}]
  %s9 = sld [smem:[#allocation0]]
  $region57: #{_level_forward.1} parent=0
    _
  %s11 = ssub.s32 1, %s9
  %s12 = scalar_select 0, %s11, %s9
  %s13 = sshll.u32 %s0, 4
  %s14 = int_to_ptr.vmem [resolvable:$true] %s13
  %16 = dma.vmem_to_smem %s14, 16, [#allocation3], [#allocation2]
  %s17 = sshll.u32 %s1, 4
  %s18 = int_to_ptr.vmem [resolvable:$true] %s17
  %20 = dma.vmem_to_smem %s18, 16, [#allocation4], [#allocation2]
  %21 = dma.done [#allocation2], 32
  %22 = sfence
  loop: start=0, step=1, limit=4
  $region2: #{_level_forward.1} parent=0 // loop_pre_header
    _
  $region3: #{_level_forward.1} parent=0 // loop_header
    %s24 = sphi 0, %s28
    %p25 = scmp.ge.s32.totalorder %s24, 4
    %s34 = sphi 0, %s36
    %s37 = sphi 0, %s34
    %s38 = sphi 0, %s37
    %s54 = sphi 0, %s38
    %s58 = sphi 0, %s58
    %s60 = sphi 0, %s58
    %s61 = sphi 0, %s60
    %s75 = sphi 0, %s61
    %s79 = sphi 0, %s79
    %s81 = sphi 0, %s79
    %s82 = sphi 0, %s81
    %s96 = sphi 0, %s82
    %s100 = sphi 0, %s100
    %s102 = sphi 0, %s100
    %s103 = sphi 0, %s102
    %s117 = sphi 0, %s103
    %s121 = sphi 0, %s121
    %s123 = sphi 0, %s121
    %s124 = sphi 0, %s123
    %s138 = sphi 0, %s124
    %s144 = sphi 0, %s146
    %s147 = sphi 0, %s144
    %s148 = sphi 0, %s147
    %s164 = sphi 0, %s148
    %s170 = sphi 0, %s172
    %s173 = sphi 0, %s170
    %s174 = sphi 0, %s173
    %s190 = sphi 0, %s174
  $region4: #{_level_forward.1} parent=0 // loop_header_branch
    %27 = sbr.rel (%p25) target = $region8
  $region5: #{_level_forward.1} parent=0 // loop_body
    %s29 = ssub.s32 %s24, 1
    %s30 = ssub.s32 %s24, 2
    %s31 = sadd.s32 %s24, 1
    %s32 = ssub.s32 %s24, %s31
    %p33 = scmp.eq.s32.totalorder %s32, 0
    %s35 = sadd.s32 %s34, 1
    %s36 = scalar_select %p33, %s34, %s35
    %p39 = pneg %p33
    %p40 = scmp.eq.s32.totalorder %s24, 1
    %p41 = por %p39, %p40
    %p42 = scmp.ne.s32.totalorder %s34, %s37
    %p43 = scmp.eq.s32.totalorder %s24, 0
    %p44 = por %p42, %p43
    %p45 = scmp.ne.s32.totalorder %s34, %s37
    %p46 = scmp.eq.s32.totalorder %s29, 1
    %p47 = por %p45, %p46
    %p48 = scmp.ne.s32.totalorder %s37, %s38
    %p49 = scmp.eq.s32.totalorder %s29, 0
    %p50 = por %p48, %p49
    %p51 = scmp.ne.s32.totalorder %s37, %s38
    %p52 = scmp.eq.s32.totalorder %s30, 1
    %p53 = por %p51, %p52
    %p55 = scmp.ne.s32.totalorder %s38, %s54
    %p56 = scmp.eq.s32.totalorder %s30, 0
    %p57 = por %p55, %p56
    %s59 = sadd.s32 %s58, 1
    %p62 = scmp.eq.s32.totalorder %s24, 1
    %p63 = scmp.ne.s32.totalorder %s58, %s60
    %p64 = scmp.eq.s32.totalorder %s24, 0
    %p65 = por %p63, %p64
    %p66 = scmp.ne.s32.totalorder %s58, %s60
    %p67 = scmp.eq.s32.totalorder %s29, 1
    %p68 = por %p66, %p67
    %p69 = scmp.ne.s32.totalorder %s60, %s61
    %p70 = scmp.eq.s32.totalorder %s29, 0
    %p71 = por %p69, %p70
    %p72 = scmp.ne.s32.totalorder %s60, %s61
    %p73 = scmp.eq.s32.totalorder %s30, 1
    %p74 = por %p72, %p73
    %p76 = scmp.ne.s32.totalorder %s61, %s75
    %p77 = scmp.eq.s32.totalorder %s30, 0
    %p78 = por %p76, %p77
    %s80 = sadd.s32 %s79, 1
    %p83 = scmp.eq.s32.totalorder %s24, 1
    %p84 = scmp.ne.s32.totalorder %s79, %s81
    %p85 = scmp.eq.s32.totalorder %s24, 0
    %p86 = por %p84, %p85
    %p87 = scmp.ne.s32.totalorder %s79, %s81
    %p88 = scmp.eq.s32.totalorder %s29, 1
    %p89 = por %p87, %p88
    %p90 = scmp.ne.s32.totalorder %s81, %s82
    %p91 = scmp.eq.s32.totalorder %s29, 0
    %p92 = por %p90, %p91
    %p93 = scmp.ne.s32.totalorder %s81, %s82
    %p94 = scmp.eq.s32.totalorder %s30, 1
    %p95 = por %p93, %p94
    %p97 = scmp.ne.s32.totalorder %s82, %s96
    %p98 = scmp.eq.s32.totalorder %s30, 0
    %p99 = por %p97, %p98
    %s101 = sadd.s32 %s100, 1
    %p104 = scmp.eq.s32.totalorder %s24, 1
    %p105 = scmp.ne.s32.totalorder %s100, %s102
    %p106 = scmp.eq.s32.totalorder %s24, 0
    %p107 = por %p105, %p106
    %p108 = scmp.ne.s32.totalorder %s100, %s102
    %p109 = scmp.eq.s32.totalorder %s29, 1
    %p110 = por %p108, %p109
    %p111 = scmp.ne.s32.totalorder %s102, %s103
    %p112 = scmp.eq.s32.totalorder %s29, 0
    %p113 = por %p111, %p112
    %p114 = scmp.ne.s32.totalorder %s102, %s103
    %p115 = scmp.eq.s32.totalorder %s30, 1
    %p116 = por %p114, %p115
    %p118 = scmp.ne.s32.totalorder %s103, %s117
    %p119 = scmp.eq.s32.totalorder %s30, 0
    %p120 = por %p118, %p119
    %s122 = sadd.s32 %s121, 1
    %p125 = scmp.eq.s32.totalorder %s24, 1
    %p126 = scmp.ne.s32.totalorder %s121, %s123
    %p127 = scmp.eq.s32.totalorder %s24, 0
    %p128 = por %p126, %p127
    %p129 = scmp.ne.s32.totalorder %s121, %s123
    %p130 = scmp.eq.s32.totalorder %s29, 1
    %p131 = por %p129, %p130
    %p132 = scmp.ne.s32.totalorder %s123, %s124
    %p133 = scmp.eq.s32.totalorder %s29, 0
    %p134 = por %p132, %p133
    %p135 = scmp.ne.s32.totalorder %s123, %s124
    %p136 = scmp.eq.s32.totalorder %s30, 1
    %p137 = por %p135, %p136
    %p139 = scmp.ne.s32.totalorder %s124, %s138
    %p140 = scmp.eq.s32.totalorder %s30, 0
    %p141 = por %p139, %p140
    %s142 = ssub.s32 %s24, %s31
    %p143 = scmp.eq.s32.totalorder %s142, 0
    %s145 = sadd.s32 %s144, 1
    %s146 = scalar_select %p143, %s144, %s145
    %p149 = pneg %p143
    %p150 = scmp.eq.s32.totalorder %s24, 1
    %p151 = por %p149, %p150
    %p152 = scmp.ne.s32.totalorder %s144, %s147
    %p153 = scmp.eq.s32.totalorder %s24, 0
    %p154 = por %p152, %p153
    %p155 = scmp.ne.s32.totalorder %s144, %s147
    %p156 = scmp.eq.s32.totalorder %s29, 1
    %p157 = por %p155, %p156
    %p158 = scmp.ne.s32.totalorder %s147, %s148
    %p159 = scmp.eq.s32.totalorder %s29, 0
    %p160 = por %p158, %p159
    %p161 = scmp.ne.s32.totalorder %s147, %s148
    %p162 = scmp.eq.s32.totalorder %s30, 1
    %p163 = por %p161, %p162
    %p165 = scmp.ne.s32.totalorder %s148, %s164
    %p166 = scmp.eq.s32.totalorder %s30, 0
    %p167 = por %p165, %p166
    %s168 = ssub.s32 %s24, %s31
    %p169 = scmp.eq.s32.totalorder %s168, 0
    %s171 = sadd.s32 %s170, 1
    %s172 = scalar_select %p169, %s170, %s171
    %p175 = pneg %p169
    %p176 = scmp.eq.s32.totalorder %s24, 1
    %p177 = por %p175, %p176
    %p178 = scmp.ne.s32.totalorder %s170, %s173
    %p179 = scmp.eq.s32.totalorder %s24, 0
    %p180 = por %p178, %p179
    %p181 = scmp.ne.s32.totalorder %s170, %s173
    %p182 = scmp.eq.s32.totalorder %s29, 1
    %p183 = por %p181, %p182
    %p184 = scmp.ne.s32.totalorder %s173, %s174
    %p185 = scmp.eq.s32.totalorder %s29, 0
    %p186 = por %p184, %p185
    %p187 = scmp.ne.s32.totalorder %s173, %s174
    %p188 = scmp.eq.s32.totalorder %s30, 1
    %p189 = por %p187, %p188
    %p191 = scmp.ne.s32.totalorder %s174, %s190
    %p192 = scmp.eq.s32.totalorder %s30, 0
    %p193 = por %p191, %p192
    %p194 = scmp.le.s32.totalorder 1, %s24
    %p195 = scmp.lt.s32.totalorder %s24, 3
    %p196 = pnand %p194, %p195
    %p197 = pneg %p196
    // Predicated region
    $region9: #{_level_forward.1} parent=5 // pred_check
      _
    $region10: #{_level_forward.1} parent=5 // pred_check_branch
      %199 = sbr.rel (%p196) target = $region12
    $region11: #{_level_forward.1} parent=5 // pred_region
      %s200 = ssub.s32 %s24, 1
      // Predicated region
      $region13: #{_level_forward.1} parent=11 // pred_check
        %p201 = pneg %p71
      $region14: #{_level_forward.1} parent=11 // pred_check_branch
        %203 = sbr.rel (%p201) target = $region16
      $region15: #{_level_forward.1} parent=11 // pred_region
        _
      $region16: #{_level_forward.1} parent=11 // pred_fallthru
        _
      // Predicated region
      $region17: #{_level_forward.1} parent=11 // pred_check
        %p204 = pneg %p92
      $region18: #{_level_forward.1} parent=11 // pred_check_branch
        %206 = sbr.rel (%p204) target = $region20
      $region19: #{_level_forward.1} parent=11 // pred_region
        _
      $region20: #{_level_forward.1} parent=11 // pred_fallthru
        _
      // Predicated region
      $region21: #{_level_forward.1} parent=11 // pred_check
        %p207 = pneg %p113
      $region22: #{_level_forward.1} parent=11 // pred_check_branch
        %209 = sbr.rel (%p207) target = $region24
      $region23: #{_level_forward.1} parent=11 // pred_region
        _
      $region24: #{_level_forward.1} parent=11 // pred_fallthru
        _
      // Predicated region
      $region25: #{_level_forward.1} parent=11 // pred_check
        %p210 = pneg %p134
      $region26: #{_level_forward.1} parent=11 // pred_check_branch
        %212 = sbr.rel (%p210) target = $region28
      $region27: #{_level_forward.1} parent=11 // pred_region
        _
      $region28: #{_level_forward.1} parent=11 // pred_fallthru
        _
    $region12: #{_level_forward.1} parent=5 // pred_fallthru
      _
    %p213 = scmp.lt.s32.totalorder %s24, 2
    // Predicated region
    $region29: #{_level_forward.1} parent=5 // pred_check
      %p214 = pneg %p213
    $region30: #{_level_forward.1} parent=5 // pred_check_branch
      %216 = sbr.rel (%p214) target = $region32
    $region31: #{_level_forward.1} parent=5 // pred_region
      // Predicated region
      $region33: #{_level_forward.1} parent=31 // pred_check
        %p217 = pneg %p44
      $region34: #{_level_forward.1} parent=31 // pred_check_branch
        %219 = sbr.rel (%p217) target = $region36
      $region35: #{_level_forward.1} parent=31 // pred_region
        %p220 = scmp.lt.s32.totalorder %s24, 1
        %s221 = scalar_select %p220, %s24, 1
        %s222 = smul.addr %s221, 2
        %s223 = smul.addr %s222, 8
        %s224 = scalar_lea.vmem %s2, %s223
      $region36: #{_level_forward.1} parent=31 // pred_fallthru
        _
      // Predicated region
      $region37: #{_level_forward.1} parent=31 // pred_check
        %p225 = pneg %p154
      $region38: #{_level_forward.1} parent=31 // pred_check_branch
        %227 = sbr.rel (%p225) target = $region40
      $region39: #{_level_forward.1} parent=31 // pred_region
        %p228 = scmp.lt.s32.totalorder %s24, 1
        %s229 = scalar_select %p228, %s24, 1
        %s230 = smul.addr %s229, 8
        %s231 = scalar_lea.vmem %s7, %s230
      $region40: #{_level_forward.1} parent=31 // pred_fallthru
        _
    $region32: #{_level_forward.1} parent=5 // pred_fallthru
      _
    %p232 = scmp.le.s32.totalorder 1, %s24
    %p233 = scmp.lt.s32.totalorder %s24, 3
    %p234 = pnand %p232, %p233
    %p235 = pneg %p234
    // Predicated region
    $region41: #{_level_forward.1} parent=5 // pred_check
      _
    $region42: #{_level_forward.1} parent=5 // pred_check_branch
      %237 = sbr.rel (%p234) target = $region44
    $region43: #{_level_forward.1} parent=5 // pred_region
      %s238 = ssub.s32 %s24, 1
      %p239 = scmp.lt.s32.totalorder %s29, 1
      %s240 = scalar_select %p239, %s29, 1
      %s241 = smul.addr %s240, 2
      %s242 = smul.addr %s241, 8
      %s243 = scalar_lea.vmem %s2, %s242
      %p244 = pneg %p50
      %p245 = pneg %p47
      %p246 = pneg %p71
      %p247 = pneg %p68
      %p248 = pneg %p92
      %p249 = pneg %p89
      %p250 = pneg %p113
      %p251 = pneg %p110
      %p252 = pneg %p134
      %p253 = pneg %p131
      %p254 = scmp.lt.s32.totalorder %s29, 1
      %s255 = scalar_select %p254, %s29, 1
      %s256 = smul.addr %s255, 8
      %s257 = scalar_lea.vmem %s7, %s256
      %p258 = pneg %p160
      %p259 = pneg %p157
      %p260 = pneg %p186
      %p261 = pneg %p183
      %p262 = scmp.lt.s32.totalorder %s29, 1
      %s263 = scalar_select %p262, %s29, 1
      %s264 = smul.addr %s263, 8
      %s265 = scalar_lea.vmem %s8, %s264
      %p266 = scmp.lt.s32.totalorder %s29, 1
      %s267 = scalar_select %p266, %s29, 1
      %s268 = smul.addr %s267, 2
      %s269 = smul.addr %s268, 8
      %s270 = scalar_lea.vmem %s2, %s269
      %p271 = scmp.lt.s32.totalorder %s29, 1
      %s272 = scalar_select %p271, %s29, 1
      %s273 = smul.addr %s272, 8
      %s274 = scalar_lea.vmem %s7, %s273
      %p275 = scmp.lt.s32.totalorder %s29, 1
      %s276 = scalar_select %p275, %s29, 1
      %s277 = smul.addr %s276, 8
      %s278 = scalar_lea.vmem %s8, %s277
      %s280 = sld [smem:[#allocation3 + %s29]]
      %s281 = sld [smem:[#allocation4 + %s29]]
      %v282 = vlaneseq
      %v283 = vand.u32 %v282, 127
      %v284 = vlaneseq
      %v285 = vshrl.u32 %v284, 7
      %s286 = ssub.s32 %s280, 4
      %v287 = vstv %s286
      %v288 = vadd.s32 %v285, %v287
      %vm289 = vcmp.eq.s32.totalorder %v283, %v288
      %v290 = vsel %vm289, 1, 0
      %v291 = vcvt.s32.f32 %v290
      %v292 = vadd.s32 %v285, 8
      %v293 = vadd.s32 %v285, 16
      %v294 = vadd.s32 %v285, 24
      %s295 = ssub.s32 %s281, 4
      %v296 = vstv %s295
      %v297 = vadd.s32 %v283, %v296
      %vm298 = vcmp.eq.s32.totalorder %v285, %v297
      %vm299 = vcmp.eq.s32.totalorder %v292, %v297
      %vm300 = vcmp.eq.s32.totalorder %v293, %v297
      %vm301 = vcmp.eq.s32.totalorder %v294, %v297
      %v302 = vsel %vm298, 1, 0
      %v303 = vsel %vm299, 1, 0
      %v304 = vsel %vm300, 1, 0
      %v305 = vsel %vm301, 1, 0
      %v306 = vcvt.s32.f32 %v302
      %v307 = vcvt.s32.f32 %v303
      %v308 = vcvt.s32.f32 %v304
      %v309 = vcvt.s32.f32 %v305
      %v310 = vld [vmem:[%s4] sm:$0xff]
      %v311 = vld [vmem:[%s4 + $0x8] sm:$0xff]
      %vm312 = vcmask 261120
      %v314 = vsel %vm312, %v310, 0
      %v317 = vsel %vm312, %v311, 0
      %319 = vmatprep.subr.mxu0 0.0
      %320 = vmatpush1.msra.mxu0 %v306
      %321 = vmatprep.subr.mxu0 0.0
      %322 = vmatpush1.msra.mxu0 %v307
      %323 = vmatprep.subr.mxu0 0.0
      %324 = vmatpush1.msra.mxu0 %v308
      %325 = vmatprep.subr.mxu0 0.0
      %326 = vmatpush1.msra.mxu0 %v309
      %327 = vmatprep.subr.mxu0 0.0
      %328 = vmatpush1.msra.mxu0 0.0
      %329 = vmatprep.subr.mxu0 0.0
      %330 = vmatpush1.msra.mxu0 0.0
      %331 = vmatprep.subr.mxu0 0.0
      %332 = vmatpush1.msra.mxu0 0.0
      %333 = vmatprep.subr.mxu0 0.0
      %334 = vmatpush1.msra.mxu0 0.0
      %335 = vmatprep.subr.mxu0 0.0
      %336 = vmatpush1.msra.mxu0 0.0
      %337 = vmatprep.subr.mxu0 0.0
      %338 = vmatpush1.msra.mxu0 0.0
      %339 = vmatprep.subr.mxu0 0.0
      %340 = vmatpush1.msra.mxu0 0.0
      %341 = vmatprep.subr.mxu0 0.0
      %342 = vmatpush1.msra.mxu0 0.0
      %343 = vmatprep.subr.mxu0 0.0
      %344 = vmatpush1.msra.mxu0 0.0
      %345 = vmatprep.subr.mxu0 0.0
      %346 = vmatpush1.msra.mxu0 0.0
      %347 = vmatprep.subr.mxu0 0.0
      %348 = vmatpush1.msra.mxu0 0.0
      %349 = vmatprep.subr.mxu0 0.0
      %350 = vmatpush1.msra.mxu0 0.0
      %351 = vmatprep.subr.mxu0 0.0
      %352 = vmatpush1.msra.mxu0 0.0
      %353 = vmatprep.subr.mxu0 0.0
      %354 = vmatpush1.msra.mxu0 0.0
      %355 = vmatprep.subr.mxu0 0.0
      %356 = vmatpush1.msra.mxu0 0.0
      %357 = vmatprep.subr.mxu0 0.0
      %358 = vmatpush1.msra.mxu0 0.0
      %359 = vmatprep.subr.mxu0 0.0
      %360 = vmatpush1.msra.mxu0 0.0
      %361 = vmatprep.subr.mxu0 0.0
      %362 = vmatpush1.msra.mxu0 0.0
      %363 = vmatprep.subr.mxu0 0.0
      %364 = vmatpush1.msra.mxu0 0.0
      %365 = vmatprep.subr.mxu0 0.0
      %366 = vmatpush1.msra.mxu0 0.0
      %367 = vmatprep.subr.mxu0 0.0
      %368 = vmatpush1.msra.mxu0 0.0
      %369 = vmatprep.subr.mxu0 0.0
      %370 = vmatpush1.msra.mxu0 0.0
      %371 = vmatprep.subr.mxu0 0.0
      %372 = vmatpush1.msra.mxu0 0.0
      %373 = vmatprep.subr.mxu0 0.0
      %374 = vmatpush1.msra.mxu0 0.0
      %375 = vmatprep.subr.mxu0 0.0
      %376 = vmatpush1.msra.mxu0 0.0
      %377 = vmatprep.subr.mxu0 0.0
      %378 = vmatpush1.msra.mxu0 0.0
      %379 = vmatprep.subr.mxu0 0.0
      %380 = vmatpush1.msra.mxu0 0.0
      %381 = vmatprep.subr.mxu0 0.0
      %382 = vmatpush1.msra.mxu0 0.0
      %383 = vmatprep.mubr.f32.mxu0 0.0
      %384 = vmatmul.mubr.f32.gmra.mrb[0].mxu0 %v314
      %v385 = vpop.f32.mrb[0].mxu0
      %v386 = vadd.f32 0.0, %v385
      %v387 = vpop.f32.mrb[0].mxu0
      %388 = vmatprep.mubr.f32.mxu0 0.0
      %389 = vmatmul.mubr.f32.gmra.mrb[0].mxu0 %v317
      %v390 = vpop.f32.mrb[0].mxu0
      %v391 = vadd.f32 0.0, %v390
      %v392 = vpop.f32.mrb[0].mxu0
      %393 = vdwg.mxu0
      %v394 = vld [vmem:[%s270] sm:$0xff]
      %v395 = vld [vmem:[%s270 + $0x8] sm:$0xff]
      %v396 = vld [vmem:[%s3] sm:$0xff]
      %v397 = vld [vmem:[%s3 + $0x8] sm:$0xff]
      %v398 = vld [vmem:[%s3 + $0x10] sm:$0xff]
      %v399 = vld [vmem:[%s3 + $0x18] sm:$0xff]
      %v401 = vsel %vm312, %v291, 0
      %403 = vmatprep.subr.mxu0 0.0
      %404 = vmatpush1.msra.mxu0 %v396
      %405 = vmatprep.subr.mxu0 0.0
      %406 = vmatpush1.msra.mxu0 %v397
      %407 = vmatprep.subr.mxu0 0.0
      %408 = vmatpush1.msra.mxu0 %v398
      %409 = vmatprep.subr.mxu0 0.0
      %410 = vmatpush1.msra.mxu0 %v399
      %411 = vmatprep.subr.mxu0 0.0
      %412 = vmatpush1.msra.mxu0 0.0
      %413 = vmatprep.subr.mxu0 0.0
      %414 = vmatpush1.msra.mxu0 0.0
      %415 = vmatprep.subr.mxu0 0.0
      %416 = vmatpush1.msra.mxu0 0.0
      %417 = vmatprep.subr.mxu0 0.0
      %418 = vmatpush1.msra.mxu0 0.0
      %419 = vmatprep.subr.mxu0 0.0
      %420 = vmatpush1.msra.mxu0 0.0
      %421 = vmatprep.subr.mxu0 0.0
      %422 = vmatpush1.msra.mxu0 0.0
      %423 = vmatprep.subr.mxu0 0.0
      %424 = vmatpush1.msra.mxu0 0.0
      %425 = vmatprep.subr.mxu0 0.0
      %426 = vmatpush1.msra.mxu0 0.0
      %427 = vmatprep.subr.mxu0 0.0
      %428 = vmatpush1.msra.mxu0 0.0
      %429 = vmatprep.subr.mxu0 0.0
      %430 = vmatpush1.msra.mxu0 0.0
      %431 = vmatprep.subr.mxu0 0.0
      %432 = vmatpush1.msra.mxu0 0.0
      %433 = vmatprep.subr.mxu0 0.0
      %434 = vmatpush1.msra.mxu0 0.0
      %435 = vmatprep.subr.mxu0 0.0
      %436 = vmatpush1.msra.mxu0 0.0
      %437 = vmatprep.subr.mxu0 0.0
      %438 = vmatpush1.msra.mxu0 0.0
      %439 = vmatprep.subr.mxu0 0.0
      %440 = vmatpush1.msra.mxu0 0.0
      %441 = vmatprep.subr.mxu0 0.0
      %442 = vmatpush1.msra.mxu0 0.0
      %443 = vmatprep.subr.mxu0 0.0
      %444 = vmatpush1.msra.mxu0 0.0
      %445 = vmatprep.subr.mxu0 0.0
      %446 = vmatpush1.msra.mxu0 0.0
      %447 = vmatprep.subr.mxu0 0.0
      %448 = vmatpush1.msra.mxu0 0.0
      %449 = vmatprep.subr.mxu0 0.0
      %450 = vmatpush1.msra.mxu0 0.0
      %451 = vmatprep.subr.mxu0 0.0
      %452 = vmatpush1.msra.mxu0 0.0
      %453 = vmatprep.subr.mxu0 0.0
      %454 = vmatpush1.msra.mxu0 0.0
      %455 = vmatprep.subr.mxu0 0.0
      %456 = vmatpush1.msra.mxu0 0.0
      %457 = vmatprep.subr.mxu0 0.0
      %458 = vmatpush1.msra.mxu0 0.0
      %459 = vmatprep.subr.mxu0 0.0
      %460 = vmatpush1.msra.mxu0 0.0
      %461 = vmatprep.subr.mxu0 0.0
      %462 = vmatpush1.msra.mxu0 0.0
      %463 = vmatprep.subr.mxu0 0.0
      %464 = vmatpush1.msra.mxu0 0.0
      %465 = vmatprep.subr.mxu0 0.0
      %466 = vmatpush1.msra.mxu0 0.0
      %467 = vmatprep.mubr.f32.mxu0 0.0
      %468 = vmatmul.mubr.f32.gmra.mrb[0].mxu0 %v401
      %v469 = vpop.f32.mrb[0].mxu0
      %v470 = vadd.f32 0.0, %v469
      %v471 = vpop.f32.mrb[0].mxu0
      %472 = vdwg.mxu0
      %vm473 = vcmask 130048
      %v475 = vsel %vm473, %v470, 0
      %477 = vmatprep.subr.mxu0 0.0
      %478 = vmatpush1.msra.mxu0 %v394
      %479 = vmatprep.subr.mxu0 0.0
      %480 = vmatpush1.msra.mxu0 %v395
      %481 = vmatprep.subr.mxu0 0.0
      %482 = vmatpush1.msra.mxu0 0.0
      %483 = vmatprep.subr.mxu0 0.0
      %484 = vmatpush1.msra.mxu0 0.0
      %485 = vmatprep.subr.mxu0 0.0
      %486 = vmatpush1.msra.mxu0 0.0
      %487 = vmatprep.subr.mxu0 0.0
      %488 = vmatpush1.msra.mxu0 0.0
      %489 = vmatprep.subr.mxu0 0.0
      %490 = vmatpush1.msra.mxu0 0.0
      %491 = vmatprep.subr.mxu0 0.0
      %492 = vmatpush1.msra.mxu0 0.0
      %493 = vmatprep.subr.mxu0 0.0
      %494 = vmatpush1.msra.mxu0 0.0
      %495 = vmatprep.subr.mxu0 0.0
      %496 = vmatpush1.msra.mxu0 0.0
      %497 = vmatprep.subr.mxu0 0.0
      %498 = vmatpush1.msra.mxu0 0.0
      %499 = vmatprep.subr.mxu0 0.0
      %500 = vmatpush1.msra.mxu0 0.0
      %501 = vmatprep.subr.mxu0 0.0
      %502 = vmatpush1.msra.mxu0 0.0
      %503 = vmatprep.subr.mxu0 0.0
      %504 = vmatpush1.msra.mxu0 0.0
      %505 = vmatprep.subr.mxu0 0.0
      %506 = vmatpush1.msra.mxu0 0.0
      %507 = vmatprep.subr.mxu0 0.0
      %508 = vmatpush1.msra.mxu0 0.0
      %509 = vmatprep.subr.mxu0 0.0
      %510 = vmatpush1.msra.mxu0 0.0
      %511 = vmatprep.subr.mxu0 0.0
      %512 = vmatpush1.msra.mxu0 0.0
      %513 = vmatprep.subr.mxu0 0.0
      %514 = vmatpush1.msra.mxu0 0.0
      %515 = vmatprep.subr.mxu0 0.0
      %516 = vmatpush1.msra.mxu0 0.0
      %517 = vmatprep.subr.mxu0 0.0
      %518 = vmatpush1.msra.mxu0 0.0
      %519 = vmatprep.subr.mxu0 0.0
      %520 = vmatpush1.msra.mxu0 0.0
      %521 = vmatprep.subr.mxu0 0.0
      %522 = vmatpush1.msra.mxu0 0.0
      %523 = vmatprep.subr.mxu0 0.0
      %524 = vmatpush1.msra.mxu0 0.0
      %525 = vmatprep.subr.mxu0 0.0
      %526 = vmatpush1.msra.mxu0 0.0
      %527 = vmatprep.subr.mxu0 0.0
      %528 = vmatpush1.msra.mxu0 0.0
      %529 = vmatprep.subr.mxu0 0.0
      %530 = vmatpush1.msra.mxu0 0.0
      %531 = vmatprep.subr.mxu0 0.0
      %532 = vmatpush1.msra.mxu0 0.0
      %533 = vmatprep.subr.mxu0 0.0
      %534 = vmatpush1.msra.mxu0 0.0
      %535 = vmatprep.subr.mxu0 0.0
      %536 = vmatpush1.msra.mxu0 0.0
      %537 = vmatprep.subr.mxu0 0.0
      %538 = vmatpush1.msra.mxu0 0.0
      %539 = vmatprep.subr.mxu0 0.0
      %540 = vmatpush1.msra.mxu0 0.0
      %541 = vmatprep.mubr.f32.mxu0 0.0
      %542 = vmatmul.mubr.f32.gmra.mrb[0].mxu0 %v475
      %v543 = vpop.f32.mrb[0].mxu0
      %v544 = vadd.f32 0.0, %v543
      %v545 = vpop.f32.mrb[0].mxu0
      %546 = vdwg.mxu0
      %v547 = vpack.c.bf16 %v544, %v544
      %v548 = vld [vmem:[%s5] sm:$0xf]
      %v549 = vld [vmem:[%s5 + $0x4] sm:$0xf]
      %v550 = vld [vmem:[%s5 + $0x8] sm:$0xf]
      %v551 = vld [vmem:[%s5 + $0xc] sm:$0xf]
      %v552 = vld [vmem:[%s5 + $0x10] sm:$0xf]
      %v553 = vld [vmem:[%s5 + $0x14] sm:$0xf]
      %v554 = vld [vmem:[%s5 + $0x18] sm:$0xf]
      %v555 = vld [vmem:[%s5 + $0x1c] sm:$0xf]
      %s556 = scalar_lea.vmem %s3, 32
      %v557 = vld [vmem:[%s556] sm:$0xff]
      %v558 = vld [vmem:[%s556 + $0x8] sm:$0xff]
      %v559 = vld [vmem:[%s556 + $0x10] sm:$0xff]
      %v560 = vld [vmem:[%s556 + $0x18] sm:$0xff]
      %561 = vmatprep.subr.mxu0 0.0
      %562 = vmatpush1.msra.mxu0 %v557
      %563 = vmatprep.subr.mxu0 0.0
      %564 = vmatpush1.msra.mxu0 %v558
      %565 = vmatprep.subr.mxu0 0.0
      %566 = vmatpush1.msra.mxu0 %v559
      %567 = vmatprep.subr.mxu0 0.0
      %568 = vmatpush1.msra.mxu0 %v560
      %569 = vmatprep.subr.mxu0 0.0
      %570 = vmatpush1.msra.mxu0 0.0
      %571 = vmatprep.subr.mxu0 0.0
      %572 = vmatpush1.msra.mxu0 0.0
      %573 = vmatprep.subr.mxu0 0.0
      %574 = vmatpush1.msra.mxu0 0.0
      %575 = vmatprep.subr.mxu0 0.0
      %576 = vmatpush1.msra.mxu0 0.0
      %577 = vmatprep.subr.mxu0 0.0
      %578 = vmatpush1.msra.mxu0 0.0
      %579 = vmatprep.subr.mxu0 0.0
      %580 = vmatpush1.msra.mxu0 0.0
      %581 = vmatprep.subr.mxu0 0.0
      %582 = vmatpush1.msra.mxu0 0.0
      %583 = vmatprep.subr.mxu0 0.0
      %584 = vmatpush1.msra.mxu0 0.0
      %585 = vmatprep.subr.mxu0 0.0
      %586 = vmatpush1.msra.mxu0 0.0
      %587 = vmatprep.subr.mxu0 0.0
      %588 = vmatpush1.msra.mxu0 0.0
      %589 = vmatprep.subr.mxu0 0.0
      %590 = vmatpush1.msra.mxu0 0.0
      %591 = vmatprep.subr.mxu0 0.0
      %592 = vmatpush1.msra.mxu0 0.0
      %593 = vmatprep.subr.mxu0 0.0
      %594 = vmatpush1.msra.mxu0 0.0
      %595 = vmatprep.subr.mxu0 0.0
      %596 = vmatpush1.msra.mxu0 0.0
      %597 = vmatprep.subr.mxu0 0.0
      %598 = vmatpush1.msra.mxu0 0.0
      %599 = vmatprep.subr.mxu0 0.0
      %600 = vmatpush1.msra.mxu0 0.0
      %601 = vmatprep.subr.mxu0 0.0
      %602 = vmatpush1.msra.mxu0 0.0
      %603 = vmatprep.subr.mxu0 0.0
      %604 = vmatpush1.msra.mxu0 0.0
      %605 = vmatprep.subr.mxu0 0.0
      %606 = vmatpush1.msra.mxu0 0.0
      %607 = vmatprep.subr.mxu0 0.0
      %608 = vmatpush1.msra.mxu0 0.0
      %609 = vmatprep.subr.mxu0 0.0
      %610 = vmatpush1.msra.mxu0 0.0
      %611 = vmatprep.subr.mxu0 0.0
      %612 = vmatpush1.msra.mxu0 0.0
      %613 = vmatprep.subr.mxu0 0.0
      %614 = vmatpush1.msra.mxu0 0.0
      %615 = vmatprep.subr.mxu0 0.0
      %616 = vmatpush1.msra.mxu0 0.0
      %617 = vmatprep.subr.mxu0 0.0
      %618 = vmatpush1.msra.mxu0 0.0
      %619 = vmatprep.subr.mxu0 0.0
      %620 = vmatpush1.msra.mxu0 0.0
      %621 = vmatprep.subr.mxu0 0.0
      %622 = vmatpush1.msra.mxu0 0.0
      %623 = vmatprep.subr.mxu0 0.0
      %624 = vmatpush1.msra.mxu0 0.0
      %625 = vmatprep.mubr.f32.mxu0 0.0
      %626 = vmatmul.mubr.f32.gmra.mrb[0].mxu0 %v401
      %v627 = vpop.f32.mrb[0].mxu0
      %v628 = vadd.f32 0.0, %v627
      %v629 = vpop.f32.mrb[0].mxu0
      %630 = vdwg.mxu0
      %v632 = vsel %vm473, %v628, 0
      %634 = vmatprep.subr.mxu0 0.0
      %635 = vmatpush1.msra.mxu0 %v394
      %636 = vmatprep.subr.mxu0 0.0
      %637 = vmatpush1.msra.mxu0 %v395
      %638 = vmatprep.subr.mxu0 0.0
      %639 = vmatpush1.msra.mxu0 0.0
      %640 = vmatprep.subr.mxu0 0.0
      %641 = vmatpush1.msra.mxu0 0.0
      %642 = vmatprep.subr.mxu0 0.0
      %643 = vmatpush1.msra.mxu0 0.0
      %644 = vmatprep.subr.mxu0 0.0
      %645 = vmatpush1.msra.mxu0 0.0
      %646 = vmatprep.subr.mxu0 0.0
      %647 = vmatpush1.msra.mxu0 0.0
      %648 = vmatprep.subr.mxu0 0.0
      %649 = vmatpush1.msra.mxu0 0.0
      %650 = vmatprep.subr.mxu0 0.0
      %651 = vmatpush1.msra.mxu0 0.0
      %652 = vmatprep.subr.mxu0 0.0
      %653 = vmatpush1.msra.mxu0 0.0
      %654 = vmatprep.subr.mxu0 0.0
      %655 = vmatpush1.msra.mxu0 0.0
      %656 = vmatprep.subr.mxu0 0.0
      %657 = vmatpush1.msra.mxu0 0.0
      %658 = vmatprep.subr.mxu0 0.0
      %659 = vmatpush1.msra.mxu0 0.0
      %660 = vmatprep.subr.mxu0 0.0
      %661 = vmatpush1.msra.mxu0 0.0
      %662 = vmatprep.subr.mxu0 0.0
      %663 = vmatpush1.msra.mxu0 0.0
      %664 = vmatprep.subr.mxu0 0.0
      %665 = vmatpush1.msra.mxu0 0.0
      %666 = vmatprep.subr.mxu0 0.0
      %667 = vmatpush1.msra.mxu0 0.0
      %668 = vmatprep.subr.mxu0 0.0
      %669 = vmatpush1.msra.mxu0 0.0
      %670 = vmatprep.subr.mxu0 0.0
      %671 = vmatpush1.msra.mxu0 0.0
      %672 = vmatprep.subr.mxu0 0.0
      %673 = vmatpush1.msra.mxu0 0.0
      %674 = vmatprep.subr.mxu0 0.0
      %675 = vmatpush1.msra.mxu0 0.0
      %676 = vmatprep.subr.mxu0 0.0
      %677 = vmatpush1.msra.mxu0 0.0
      %678 = vmatprep.subr.mxu0 0.0
      %679 = vmatpush1.msra.mxu0 0.0
      %680 = vmatprep.subr.mxu0 0.0
      %681 = vmatpush1.msra.mxu0 0.0
      %682 = vmatprep.subr.mxu0 0.0
      %683 = vmatpush1.msra.mxu0 0.0
      %684 = vmatprep.subr.mxu0 0.0
      %685 = vmatpush1.msra.mxu0 0.0
      %686 = vmatprep.subr.mxu0 0.0
      %687 = vmatpush1.msra.mxu0 0.0
      %688 = vmatprep.subr.mxu0 0.0
      %689 = vmatpush1.msra.mxu0 0.0
      %690 = vmatprep.subr.mxu0 0.0
      %691 = vmatpush1.msra.mxu0 0.0
      %692 = vmatprep.subr.mxu0 0.0
      %693 = vmatpush1.msra.mxu0 0.0
      %694 = vmatprep.subr.mxu0 0.0
      %695 = vmatpush1.msra.mxu0 0.0
      %696 = vmatprep.subr.mxu0 0.0
      %697 = vmatpush1.msra.mxu0 0.0
      %698 = vmatprep.mubr.f32.mxu0 0.0
      %699 = vmatmul.mubr.f32.gmra.mrb[0].mxu0 %v632
      %v700 = vpop.f32.mrb[0].mxu0
      %v701 = vadd.f32 0.0, %v700
      %v702 = vpop.f32.mrb[0].mxu0
      %703 = vdwg.mxu0
      %v704 = vpack.c.bf16 %v701, %v701
      %s705 = scalar_lea.vmem %s5, 32
      %v706 = vld [vmem:[%s705] sm:$0xf]
      %v707 = vld [vmem:[%s705 + $0x4] sm:$0xf]
      %v708 = vld [vmem:[%s705 + $0x8] sm:$0xf]
      %v709 = vld [vmem:[%s705 + $0xc] sm:$0xf]
      %v710 = vld [vmem:[%s705 + $0x10] sm:$0xf]
      %v711 = vld [vmem:[%s705 + $0x14] sm:$0xf]
      %v712 = vld [vmem:[%s705 + $0x18] sm:$0xf]
      %v713 = vld [vmem:[%s705 + $0x1c] sm:$0xf]
      %v722 = vunpack.c.l.b16 %v706
      %v723 = vunpack.c.l.b16 %v707
      %v724 = vunpack.c.l.b16 %v708
      %v725 = vunpack.c.l.b16 %v709
      %v726 = vunpack.c.l.b16 %v710
      %v727 = vunpack.c.l.b16 %v711
      %v728 = vunpack.c.l.b16 %v712
      %v729 = vunpack.c.l.b16 %v713
      %v730 = vpack.c.b16 %v723, %v722
      %v731 = vpack.c.b16 %v725, %v724
      %v732 = vpack.c.b16 %v727, %v726
      %v733 = vpack.c.b16 %v729, %v728
      %vm738 = vcmask 523264
      %v740 = vsel %vm738, %v704, 0
      %742 = vmatprep.subr.bf16.mxu0 0
      %743 = vmatpush1.bf16.msra.mxu0 %v730
      %744 = vmatprep.subr.bf16.mxu0 0
      %745 = vmatpush1.bf16.msra.mxu0 %v731
      %746 = vmatprep.subr.bf16.mxu0 0
      %747 = vmatpush1.bf16.msra.mxu0 %v732
      %748 = vmatprep.subr.bf16.mxu0 0
      %749 = vmatpush1.bf16.msra.mxu0 %v733
      %750 = vmatprep.subr.bf16.mxu0 0
      %751 = vmatpush1.bf16.msra.mxu0 0
      %752 = vmatprep.subr.bf16.mxu0 0
      %753 = vmatpush1.bf16.msra.mxu0 0
      %754 = vmatprep.subr.bf16.mxu0 0
      %755 = vmatpush1.bf16.msra.mxu0 0
      %756 = vmatprep.subr.bf16.mxu0 0
      %757 = vmatpush1.bf16.msra.mxu0 0
      %758 = vmatprep.subr.bf16.mxu0 0
      %759 = vmatpush1.bf16.msra.mxu0 0
      %760 = vmatprep.subr.bf16.mxu0 0
      %761 = vmatpush1.bf16.msra.mxu0 0
      %762 = vmatprep.subr.bf16.mxu0 0
      %763 = vmatpush1.bf16.msra.mxu0 0
      %764 = vmatprep.subr.bf16.mxu0 0
      %765 = vmatpush1.bf16.msra.mxu0 0
      %766 = vmatprep.subr.bf16.mxu0 0
      %767 = vmatpush1.bf16.msra.mxu0 0
      %768 = vmatprep.subr.bf16.mxu0 0
      %769 = vmatpush1.bf16.msra.mxu0 0
      %770 = vmatprep.subr.bf16.mxu0 0
      %771 = vmatpush1.bf16.msra.mxu0 0
      %772 = vmatprep.subr.bf16.mxu0 0
      %773 = vmatpush1.bf16.msra.mxu0 0
      %774 = vmatprep.mubr.bf16.mxu0 0
      %775 = vmatmul.mubr.bf16.gmra.mrb[0].mxu0 %v740
      %v776 = vpop.f32.mrb[0].mxu0
      %v777 = vadd.f32 0.0, %v776
      %v778 = vpop.f32.mrb[0].mxu0
      %v779 = vpop.f32.mrb[0].mxu0
      %v780 = vpop.f32.mrb[0].mxu0
      %781 = vdwg.mxu0
      %v790 = vunpack.c.l.b16 %v548
      %v791 = vunpack.c.l.b16 %v549
      %v792 = vunpack.c.l.b16 %v550
      %v793 = vunpack.c.l.b16 %v551
      %v794 = vunpack.c.l.b16 %v552
      %v795 = vunpack.c.l.b16 %v553
      %v796 = vunpack.c.l.b16 %v554
      %v797 = vunpack.c.l.b16 %v555
      %v798 = vpack.c.b16 %v791, %v790
      %v799 = vpack.c.b16 %v793, %v792
      %v800 = vpack.c.b16 %v795, %v794
      %v801 = vpack.c.b16 %v797, %v796
      %v807 = vsel %vm738, %v547, 0
      %809 = vmatprep.subr.bf16.mxu0 0
      %810 = vmatpush1.bf16.msra.mxu0 %v798
      %811 = vmatprep.subr.bf16.mxu0 0
      %812 = vmatpush1.bf16.msra.mxu0 %v799
      %813 = vmatprep.subr.bf16.mxu0 0
      %814 = vmatpush1.bf16.msra.mxu0 %v800
      %815 = vmatprep.subr.bf16.mxu0 0
      %816 = vmatpush1.bf16.msra.mxu0 %v801
      %817 = vmatprep.subr.bf16.mxu0 0
      %818 = vmatpush1.bf16.msra.mxu0 0
      %819 = vmatprep.subr.bf16.mxu0 0
      %820 = vmatpush1.bf16.msra.mxu0 0
      %821 = vmatprep.subr.bf16.mxu0 0
      %822 = vmatpush1.bf16.msra.mxu0 0
      %823 = vmatprep.subr.bf16.mxu0 0
      %824 = vmatpush1.bf16.msra.mxu0 0
      %825 = vmatprep.subr.bf16.mxu0 0
      %826 = vmatpush1.bf16.msra.mxu0 0
      %827 = vmatprep.subr.bf16.mxu0 0
      %828 = vmatpush1.bf16.msra.mxu0 0
      %829 = vmatprep.subr.bf16.mxu0 0
      %830 = vmatpush1.bf16.msra.mxu0 0
      %831 = vmatprep.subr.bf16.mxu0 0
      %832 = vmatpush1.bf16.msra.mxu0 0
      %833 = vmatprep.subr.bf16.mxu0 0
      %834 = vmatpush1.bf16.msra.mxu0 0
      %835 = vmatprep.subr.bf16.mxu0 0
      %836 = vmatpush1.bf16.msra.mxu0 0
      %837 = vmatprep.subr.bf16.mxu0 0
      %838 = vmatpush1.bf16.msra.mxu0 0
      %839 = vmatprep.subr.bf16.mxu0 0
      %840 = vmatpush1.bf16.msra.mxu0 0
      %841 = vmatprep.mubr.bf16.mxu0 0
      %842 = vmatmul.mubr.bf16.gmra.mrb[0].mxu0 %v807
      %v843 = vpop.f32.mrb[0].mxu0
      %v844 = vadd.f32 %v777, %v843
      %v845 = vpop.f32.mrb[0].mxu0
      %v846 = vpop.f32.mrb[0].mxu0
      %v847 = vpop.f32.mrb[0].mxu0
      %848 = vdwg.mxu0
      %s849 = scalar_lea.vmem %s3, 64
      %v850 = vld [vmem:[%s849] sm:$0xff]
      %v851 = vld [vmem:[%s849 + $0x8] sm:$0xff]
      %v852 = vld [vmem:[%s849 + $0x10] sm:$0xff]
      %v853 = vld [vmem:[%s849 + $0x18] sm:$0xff]
      %854 = vmatprep.subr.mxu0 0.0
      %855 = vmatpush1.msra.mxu0 %v850
      %856 = vmatprep.subr.mxu0 0.0
      %857 = vmatpush1.msra.mxu0 %v851
      %858 = vmatprep.subr.mxu0 0.0
      %859 = vmatpush1.msra.mxu0 %v852
      %860 = vmatprep.subr.mxu0 0.0
      %861 = vmatpush1.msra.mxu0 %v853
      %862 = vmatprep.subr.mxu0 0.0
      %863 = vmatpush1.msra.mxu0 0.0
      %864 = vmatprep.subr.mxu0 0.0
      %865 = vmatpush1.msra.mxu0 0.0
      %866 = vmatprep.subr.mxu0 0.0
      %867 = vmatpush1.msra.mxu0 0.0
      %868 = vmatprep.subr.mxu0 0.0
      %869 = vmatpush1.msra.mxu0 0.0
      %870 = vmatprep.subr.mxu0 0.0
      %871 = vmatpush1.msra.mxu0 0.0
      %872 = vmatprep.subr.mxu0 0.0
      %873 = vmatpush1.msra.mxu0 0.0
      %874 = vmatprep.subr.mxu0 0.0
      %875 = vmatpush1.msra.mxu0 0.0
      %876 = vmatprep.subr.mxu0 0.0
      %877 = vmatpush1.msra.mxu0 0.0
      %878 = vmatprep.subr.mxu0 0.0
      %879 = vmatpush1.msra.mxu0 0.0
      %880 = vmatprep.subr.mxu0 0.0
      %881 = vmatpush1.msra.mxu0 0.0
      %882 = vmatprep.subr.mxu0 0.0
      %883 = vmatpush1.msra.mxu0 0.0
      %884 = vmatprep.subr.mxu0 0.0
      %885 = vmatpush1.msra.mxu0 0.0
      %886 = vmatprep.subr.mxu0 0.0
      %887 = vmatpush1.msra.mxu0 0.0
      %888 = vmatprep.subr.mxu0 0.0
      %889 = vmatpush1.msra.mxu0 0.0
      %890 = vmatprep.subr.mxu0 0.0
      %891 = vmatpush1.msra.mxu0 0.0
      %892 = vmatprep.subr.mxu0 0.0
      %893 = vmatpush1.msra.mxu0 0.0
      %894 = vmatprep.subr.mxu0 0.0
      %895 = vmatpush1.msra.mxu0 0.0
      %896 = vmatprep.subr.mxu0 0.0
      %897 = vmatpush1.msra.mxu0 0.0
      %898 = vmatprep.subr.mxu0 0.0
      %899 = vmatpush1.msra.mxu0 0.0
      %900 = vmatprep.subr.mxu0 0.0
      %901 = vmatpush1.msra.mxu0 0.0
      %902 = vmatprep.subr.mxu0 0.0
      %903 = vmatpush1.msra.mxu0 0.0
      %904 = vmatprep.subr.mxu0 0.0
      %905 = vmatpush1.msra.mxu0 0.0
      %906 = vmatprep.subr.mxu0 0.0
      %907 = vmatpush1.msra.mxu0 0.0
      %908 = vmatprep.subr.mxu0 0.0
      %909 = vmatpush1.msra.mxu0 0.0
      %910 = vmatprep.subr.mxu0 0.0
      %911 = vmatpush1.msra.mxu0 0.0
      %912 = vmatprep.subr.mxu0 0.0
      %913 = vmatpush1.msra.mxu0 0.0
      %914 = vmatprep.subr.mxu0 0.0
      %915 = vmatpush1.msra.mxu0 0.0
      %916 = vmatprep.subr.mxu0 0.0
      %917 = vmatpush1.msra.mxu0 0.0
      %918 = vmatprep.mubr.f32.mxu0 0.0
      %919 = vmatmul.mubr.f32.gmra.mrb[0].mxu0 %v401
      %v920 = vpop.f32.mrb[0].mxu0
      %v921 = vadd.f32 0.0, %v920
      %v922 = vpop.f32.mrb[0].mxu0
      %923 = vdwg.mxu0
      %v925 = vsel %vm473, %v921, 0
      %927 = vmatprep.subr.mxu0 0.0
      %928 = vmatpush1.msra.mxu0 %v394
      %929 = vmatprep.subr.mxu0 0.0
      %930 = vmatpush1.msra.mxu0 %v395
      %931 = vmatprep.subr.mxu0 0.0
      %932 = vmatpush1.msra.mxu0 0.0
      %933 = vmatprep.subr.mxu0 0.0
      %934 = vmatpush1.msra.mxu0 0.0
      %935 = vmatprep.subr.mxu0 0.0
      %936 = vmatpush1.msra.mxu0 0.0
      %937 = vmatprep.subr.mxu0 0.0
      %938 = vmatpush1.msra.mxu0 0.0
      %939 = vmatprep.subr.mxu0 0.0
      %940 = vmatpush1.msra.mxu0 0.0
      %941 = vmatprep.subr.mxu0 0.0
      %942 = vmatpush1.msra.mxu0 0.0
      %943 = vmatprep.subr.mxu0 0.0
      %944 = vmatpush1.msra.mxu0 0.0
      %945 = vmatprep.subr.mxu0 0.0
      %946 = vmatpush1.msra.mxu0 0.0
      %947 = vmatprep.subr.mxu0 0.0
      %948 = vmatpush1.msra.mxu0 0.0
      %949 = vmatprep.subr.mxu0 0.0
      %950 = vmatpush1.msra.mxu0 0.0
      %951 = vmatprep.subr.mxu0 0.0
      %952 = vmatpush1.msra.mxu0 0.0
      %953 = vmatprep.subr.mxu0 0.0
      %954 = vmatpush1.msra.mxu0 0.0
      %955 = vmatprep.subr.mxu0 0.0
      %956 = vmatpush1.msra.mxu0 0.0
      %957 = vmatprep.subr.mxu0 0.0
      %958 = vmatpush1.msra.mxu0 0.0
      %959 = vmatprep.subr.mxu0 0.0
      %960 = vmatpush1.msra.mxu0 0.0
      %961 = vmatprep.subr.mxu0 0.0
      %962 = vmatpush1.msra.mxu0 0.0
      %963 = vmatprep.subr.mxu0 0.0
      %964 = vmatpush1.msra.mxu0 0.0
      %965 = vmatprep.subr.mxu0 0.0
      %966 = vmatpush1.msra.mxu0 0.0
      %967 = vmatprep.subr.mxu0 0.0
      %968 = vmatpush1.msra.mxu0 0.0
      %969 = vmatprep.subr.mxu0 0.0
      %970 = vmatpush1.msra.mxu0 0.0
      %971 = vmatprep.subr.mxu0 0.0
      %972 = vmatpush1.msra.mxu0 0.0
      %973 = vmatprep.subr.mxu0 0.0
      %974 = vmatpush1.msra.mxu0 0.0
      %975 = vmatprep.subr.mxu0 0.0
      %976 = vmatpush1.msra.mxu0 0.0
      %977 = vmatprep.subr.mxu0 0.0
      %978 = vmatpush1.msra.mxu0 0.0
      %979 = vmatprep.subr.mxu0 0.0
      %980 = vmatpush1.msra.mxu0 0.0
      %981 = vmatprep.subr.mxu0 0.0
      %982 = vmatpush1.msra.mxu0 0.0
      %983 = vmatprep.subr.mxu0 0.0
      %984 = vmatpush1.msra.mxu0 0.0
      %985 = vmatprep.subr.mxu0 0.0
      %986 = vmatpush1.msra.mxu0 0.0
      %987 = vmatprep.subr.mxu0 0.0
      %988 = vmatpush1.msra.mxu0 0.0
      %989 = vmatprep.subr.mxu0 0.0
      %990 = vmatpush1.msra.mxu0 0.0
      %991 = vmatprep.mubr.f32.mxu0 0.0
      %992 = vmatmul.mubr.f32.gmra.mrb[0].mxu0 %v925
      %v993 = vpop.f32.mrb[0].mxu0
      %v994 = vadd.f32 0.0, %v993
      %v995 = vpop.f32.mrb[0].mxu0
      %996 = vdwg.mxu0
      %v997 = vpack.c.bf16 %v994, %v994
      %s998 = scalar_lea.vmem %s5, 64
      %v999 = vld [vmem:[%s998] sm:$0xf]
      %v1000 = vld [vmem:[%s998 + $0x4] sm:$0xf]
      %v1001 = vld [vmem:[%s998 + $0x8] sm:$0xf]
      %v1002 = vld [vmem:[%s998 + $0xc] sm:$0xf]
      %v1003 = vld [vmem:[%s998 + $0x10] sm:$0xf]
      %v1004 = vld [vmem:[%s998 + $0x14] sm:$0xf]
      %v1005 = vld [vmem:[%s998 + $0x18] sm:$0xf]
      %v1006 = vld [vmem:[%s998 + $0x1c] sm:$0xf]
      %v1015 = vunpack.c.l.b16 %v999
      %v1016 = vunpack.c.l.b16 %v1000
      %v1017 = vunpack.c.l.b16 %v1001
      %v1018 = vunpack.c.l.b16 %v1002
      %v1019 = vunpack.c.l.b16 %v1003
      %v1020 = vunpack.c.l.b16 %v1004
      %v1021 = vunpack.c.l.b16 %v1005
      %v1022 = vunpack.c.l.b16 %v1006
      %v1023 = vpack.c.b16 %v1016, %v1015
      %v1024 = vpack.c.b16 %v1018, %v1017
      %v1025 = vpack.c.b16 %v1020, %v1019
      %v1026 = vpack.c.b16 %v1022, %v1021
      %v1032 = vsel %vm738, %v997, 0
      %1034 = vmatprep.subr.bf16.mxu0 0
      %1035 = vmatpush1.bf16.msra.mxu0 %v1023
      %1036 = vmatprep.subr.bf16.mxu0 0
      %1037 = vmatpush1.bf16.msra.mxu0 %v1024
      %1038 = vmatprep.subr.bf16.mxu0 0
      %1039 = vmatpush1.bf16.msra.mxu0 %v1025
      %1040 = vmatprep.subr.bf16.mxu0 0
      %1041 = vmatpush1.bf16.msra.mxu0 %v1026
      %1042 = vmatprep.subr.bf16.mxu0 0
      %1043 = vmatpush1.bf16.msra.mxu0 0
      %1044 = vmatprep.subr.bf16.mxu0 0
      %1045 = vmatpush1.bf16.msra.mxu0 0
      %1046 = vmatprep.subr.bf16.mxu0 0
      %1047 = vmatpush1.bf16.msra.mxu0 0
      %1048 = vmatprep.subr.bf16.mxu0 0
      %1049 = vmatpush1.bf16.msra.mxu0 0
      %1050 = vmatprep.subr.bf16.mxu0 0
      %1051 = vmatpush1.bf16.msra.mxu0 0
      %1052 = vmatprep.subr.bf16.mxu0 0
      %1053 = vmatpush1.bf16.msra.mxu0 0
      %1054 = vmatprep.subr.bf16.mxu0 0
      %1055 = vmatpush1.bf16.msra.mxu0 0
      %1056 = vmatprep.subr.bf16.mxu0 0
      %1057 = vmatpush1.bf16.msra.mxu0 0
      %1058 = vmatprep.subr.bf16.mxu0 0
      %1059 = vmatpush1.bf16.msra.mxu0 0
      %1060 = vmatprep.subr.bf16.mxu0 0
      %1061 = vmatpush1.bf16.msra.mxu0 0
      %1062 = vmatprep.subr.bf16.mxu0 0
      %1063 = vmatpush1.bf16.msra.mxu0 0
      %1064 = vmatprep.subr.bf16.mxu0 0
      %1065 = vmatpush1.bf16.msra.mxu0 0
      %1066 = vmatprep.mubr.bf16.mxu0 0
      %1067 = vmatmul.mubr.bf16.gmra.mrb[0].mxu0 %v1032
      %v1068 = vpop.f32.mrb[0].mxu0
      %v1069 = vadd.f32 0.0, %v1068
      %v1070 = vpop.f32.mrb[0].mxu0
      %v1071 = vpop.f32.mrb[0].mxu0
      %v1072 = vpop.f32.mrb[0].mxu0
      %1073 = vdwg.mxu0
      %v1074 = vadd.f32 %v844, %v1069
      %v1075 = vld [vmem:[%s6] sm:$0x1]
      %v1077 = vlaneseq
      %v1078 = vshrl.u32 %v1077, 7
      %v1079 = vsub.s32 0, %v1078
      %v1080 = vrot.slane %v1075, %v1079
      %v1082 = vadd.f32 %v1074, %v1080
      %v1084 = vsel %vm473, %v1082, 0
      %1086 = vmatprep.subr.mxu0 0.0
      %1087 = vmatpush1.msra.mxu0 %v386
      %1088 = vmatprep.subr.mxu0 0.0
      %1089 = vmatpush1.msra.mxu0 %v391
      %1090 = vmatprep.subr.mxu0 0.0
      %1091 = vmatpush1.msra.mxu0 0.0
      %1092 = vmatprep.subr.mxu0 0.0
      %1093 = vmatpush1.msra.mxu0 0.0
      %1094 = vmatprep.subr.mxu0 0.0
      %1095 = vmatpush1.msra.mxu0 0.0
      %1096 = vmatprep.subr.mxu0 0.0
      %1097 = vmatpush1.msra.mxu0 0.0
      %1098 = vmatprep.subr.mxu0 0.0
      %1099 = vmatpush1.msra.mxu0 0.0
      %1100 = vmatprep.subr.mxu0 0.0
      %1101 = vmatpush1.msra.mxu0 0.0
      %1102 = vmatprep.subr.mxu0 0.0
      %1103 = vmatpush1.msra.mxu0 0.0
      %1104 = vmatprep.subr.mxu0 0.0
      %1105 = vmatpush1.msra.mxu0 0.0
      %1106 = vmatprep.subr.mxu0 0.0
      %1107 = vmatpush1.msra.mxu0 0.0
      %1108 = vmatprep.subr.mxu0 0.0
      %1109 = vmatpush1.msra.mxu0 0.0
      %1110 = vmatprep.subr.mxu0 0.0
      %1111 = vmatpush1.msra.mxu0 0.0
      %1112 = vmatprep.subr.mxu0 0.0
      %1113 = vmatpush1.msra.mxu0 0.0
      %1114 = vmatprep.subr.mxu0 0.0
      %1115 = vmatpush1.msra.mxu0 0.0
      %1116 = vmatprep.subr.mxu0 0.0
      %1117 = vmatpush1.msra.mxu0 0.0
      %1118 = vmatprep.subr.mxu0 0.0
      %1119 = vmatpush1.msra.mxu0 0.0
      %1120 = vmatprep.subr.mxu0 0.0
      %1121 = vmatpush1.msra.mxu0 0.0
      %1122 = vmatprep.subr.mxu0 0.0
      %1123 = vmatpush1.msra.mxu0 0.0
      %1124 = vmatprep.subr.mxu0 0.0
      %1125 = vmatpush1.msra.mxu0 0.0
      %1126 = vmatprep.subr.mxu0 0.0
      %1127 = vmatpush1.msra.mxu0 0.0
      %1128 = vmatprep.subr.mxu0 0.0
      %1129 = vmatpush1.msra.mxu0 0.0
      %1130 = vmatprep.subr.mxu0 0.0
      %1131 = vmatpush1.msra.mxu0 0.0
      %1132 = vmatprep.subr.mxu0 0.0
      %1133 = vmatpush1.msra.mxu0 0.0
      %1134 = vmatprep.subr.mxu0 0.0
      %1135 = vmatpush1.msra.mxu0 0.0
      %1136 = vmatprep.subr.mxu0 0.0
      %1137 = vmatpush1.msra.mxu0 0.0
      %1138 = vmatprep.subr.mxu0 0.0
      %1139 = vmatpush1.msra.mxu0 0.0
      %1140 = vmatprep.subr.mxu0 0.0
      %1141 = vmatpush1.msra.mxu0 0.0
      %1142 = vmatprep.subr.mxu0 0.0
      %1143 = vmatpush1.msra.mxu0 0.0
      %1144 = vmatprep.subr.mxu0 0.0
      %1145 = vmatpush1.msra.mxu0 0.0
      %1146 = vmatprep.subr.mxu0 0.0
      %1147 = vmatpush1.msra.mxu0 0.0
      %1148 = vmatprep.subr.mxu0 0.0
      %1149 = vmatpush1.msra.mxu0 0.0
      %1150 = vmatprep.mubr.f32.mxu0 0.0
      %1151 = vmatmul.mubr.f32.gmra.mrb[0].mxu0 %v1084
      %v1152 = vpop.f32.mrb[0].mxu0
      %v1153 = vadd.f32 0.0, %v1152
      %v1154 = vpop.f32.mrb[0].mxu0
      %1155 = vdwg.mxu0
      %1156 = vrot.lane.b32.xlu0 %v1082, 112
      %v1157 = vpop.permute.xlu0 %1156
      %v1158 = vsel %vm473, %v1157, 0
      %1160 = vmatprep.subr.mxu0 0.0
      %1161 = vmatpush1.msra.mxu0 %v386
      %1162 = vmatprep.subr.mxu0 0.0
      %1163 = vmatpush1.msra.mxu0 %v391
      %1164 = vmatprep.subr.mxu0 0.0
      %1165 = vmatpush1.msra.mxu0 0.0
      %1166 = vmatprep.subr.mxu0 0.0
      %1167 = vmatpush1.msra.mxu0 0.0
      %1168 = vmatprep.subr.mxu0 0.0
      %1169 = vmatpush1.msra.mxu0 0.0
      %1170 = vmatprep.subr.mxu0 0.0
      %1171 = vmatpush1.msra.mxu0 0.0
      %1172 = vmatprep.subr.mxu0 0.0
      %1173 = vmatpush1.msra.mxu0 0.0
      %1174 = vmatprep.subr.mxu0 0.0
      %1175 = vmatpush1.msra.mxu0 0.0
      %1176 = vmatprep.subr.mxu0 0.0
      %1177 = vmatpush1.msra.mxu0 0.0
      %1178 = vmatprep.subr.mxu0 0.0
      %1179 = vmatpush1.msra.mxu0 0.0
      %1180 = vmatprep.subr.mxu0 0.0
      %1181 = vmatpush1.msra.mxu0 0.0
      %1182 = vmatprep.subr.mxu0 0.0
      %1183 = vmatpush1.msra.mxu0 0.0
      %1184 = vmatprep.subr.mxu0 0.0
      %1185 = vmatpush1.msra.mxu0 0.0
      %1186 = vmatprep.subr.mxu0 0.0
      %1187 = vmatpush1.msra.mxu0 0.0
      %1188 = vmatprep.subr.mxu0 0.0
      %1189 = vmatpush1.msra.mxu0 0.0
      %1190 = vmatprep.subr.mxu0 0.0
      %1191 = vmatpush1.msra.mxu0 0.0
      %1192 = vmatprep.subr.mxu0 0.0
      %1193 = vmatpush1.msra.mxu0 0.0
      %1194 = vmatprep.subr.mxu0 0.0
      %1195 = vmatpush1.msra.mxu0 0.0
      %1196 = vmatprep.subr.mxu0 0.0
      %1197 = vmatpush1.msra.mxu0 0.0
      %1198 = vmatprep.subr.mxu0 0.0
      %1199 = vmatpush1.msra.mxu0 0.0
      %1200 = vmatprep.subr.mxu0 0.0
      %1201 = vmatpush1.msra.mxu0 0.0
      %1202 = vmatprep.subr.mxu0 0.0
      %1203 = vmatpush1.msra.mxu0 0.0
      %1204 = vmatprep.subr.mxu0 0.0
      %1205 = vmatpush1.msra.mxu0 0.0
      %1206 = vmatprep.subr.mxu0 0.0
      %1207 = vmatpush1.msra.mxu0 0.0
      %1208 = vmatprep.subr.mxu0 0.0
      %1209 = vmatpush1.msra.mxu0 0.0
      %1210 = vmatprep.subr.mxu0 0.0
      %1211 = vmatpush1.msra.mxu0 0.0
      %1212 = vmatprep.subr.mxu0 0.0
      %1213 = vmatpush1.msra.mxu0 0.0
      %1214 = vmatprep.subr.mxu0 0.0
      %1215 = vmatpush1.msra.mxu0 0.0
      %1216 = vmatprep.subr.mxu0 0.0
      %1217 = vmatpush1.msra.mxu0 0.0
      %1218 = vmatprep.subr.mxu0 0.0
      %1219 = vmatpush1.msra.mxu0 0.0
      %1220 = vmatprep.subr.mxu0 0.0
      %1221 = vmatpush1.msra.mxu0 0.0
      %1222 = vmatprep.subr.mxu0 0.0
      %1223 = vmatpush1.msra.mxu0 0.0
      %1224 = vmatprep.mubr.f32.mxu0 0.0
      %1225 = vmatmul.mubr.f32.gmra.mrb[0].mxu0 %v1158
      %v1226 = vpop.f32.mrb[0].mxu0
      %v1227 = vadd.f32 0.0, %v1226
      %v1228 = vpop.f32.mrb[0].mxu0
      %1229 = vdwg.mxu0
      %1230 = vrot.lane.b32.xlu0 %v1082, 96
      %v1231 = vpop.permute.xlu0 %1230
      %v1232 = vsel %vm473, %v1231, 0
      %1234 = vmatprep.subr.mxu0 0.0
      %1235 = vmatpush1.msra.mxu0 %v386
      %1236 = vmatprep.subr.mxu0 0.0
      %1237 = vmatpush1.msra.mxu0 %v391
      %1238 = vmatprep.subr.mxu0 0.0
      %1239 = vmatpush1.msra.mxu0 0.0
      %1240 = vmatprep.subr.mxu0 0.0
      %1241 = vmatpush1.msra.mxu0 0.0
      %1242 = vmatprep.subr.mxu0 0.0
      %1243 = vmatpush1.msra.mxu0 0.0
      %1244 = vmatprep.subr.mxu0 0.0
      %1245 = vmatpush1.msra.mxu0 0.0
      %1246 = vmatprep.subr.mxu0 0.0
      %1247 = vmatpush1.msra.mxu0 0.0
      %1248 = vmatprep.subr.mxu0 0.0
      %1249 = vmatpush1.msra.mxu0 0.0
      %1250 = vmatprep.subr.mxu0 0.0
      %1251 = vmatpush1.msra.mxu0 0.0
      %1252 = vmatprep.subr.mxu0 0.0
      %1253 = vmatpush1.msra.mxu0 0.0
      %1254 = vmatprep.subr.mxu0 0.0
      %1255 = vmatpush1.msra.mxu0 0.0
      %1256 = vmatprep.subr.mxu0 0.0
      %1257 = vmatpush1.msra.mxu0 0.0
      %1258 = vmatprep.subr.mxu0 0.0
      %1259 = vmatpush1.msra.mxu0 0.0
      %1260 = vmatprep.subr.mxu0 0.0
      %1261 = vmatpush1.msra.mxu0 0.0
      %1262 = vmatprep.subr.mxu0 0.0
      %1263 = vmatpush1.msra.mxu0 0.0
      %1264 = vmatprep.subr.mxu0 0.0
      %1265 = vmatpush1.msra.mxu0 0.0
      %1266 = vmatprep.subr.mxu0 0.0
      %1267 = vmatpush1.msra.mxu0 0.0
      %1268 = vmatprep.subr.mxu0 0.0
      %1269 = vmatpush1.msra.mxu0 0.0
      %1270 = vmatprep.subr.mxu0 0.0
      %1271 = vmatpush1.msra.mxu0 0.0
      %1272 = vmatprep.subr.mxu0 0.0
      %1273 = vmatpush1.msra.mxu0 0.0
      %1274 = vmatprep.subr.mxu0 0.0
      %1275 = vmatpush1.msra.mxu0 0.0
      %1276 = vmatprep.subr.mxu0 0.0
      %1277 = vmatpush1.msra.mxu0 0.0
      %1278 = vmatprep.subr.mxu0 0.0
      %1279 = vmatpush1.msra.mxu0 0.0
      %1280 = vmatprep.subr.mxu0 0.0
      %1281 = vmatpush1.msra.mxu0 0.0
      %1282 = vmatprep.subr.mxu0 0.0
      %1283 = vmatpush1.msra.mxu0 0.0
      %1284 = vmatprep.subr.mxu0 0.0
      %1285 = vmatpush1.msra.mxu0 0.0
      %1286 = vmatprep.subr.mxu0 0.0
      %1287 = vmatpush1.msra.mxu0 0.0
      %1288 = vmatprep.subr.mxu0 0.0
      %1289 = vmatpush1.msra.mxu0 0.0
      %1290 = vmatprep.subr.mxu0 0.0
      %1291 = vmatpush1.msra.mxu0 0.0
      %1292 = vmatprep.subr.mxu0 0.0
      %1293 = vmatpush1.msra.mxu0 0.0
      %1294 = vmatprep.subr.mxu0 0.0
      %1295 = vmatpush1.msra.mxu0 0.0
      %1296 = vmatprep.subr.mxu0 0.0
      %1297 = vmatpush1.msra.mxu0 0.0
      %1298 = vmatprep.mubr.f32.mxu0 0.0
      %1299 = vmatmul.mubr.f32.gmra.mrb[0].mxu0 %v1232
      %v1300 = vpop.f32.mrb[0].mxu0
      %v1301 = vadd.f32 0.0, %v1300
      %v1302 = vpop.f32.mrb[0].mxu0
      %1303 = vdwg.mxu0
      %1304 = vrot.lane.b32.xlu0 %v1082, 80
      %v1305 = vpop.permute.xlu0 %1304
      %v1306 = vsel %vm473, %v1305, 0
      %1308 = vmatprep.subr.mxu0 0.0
      %1309 = vmatpush1.msra.mxu0 %v386
      %1310 = vmatprep.subr.mxu0 0.0
      %1311 = vmatpush1.msra.mxu0 %v391
      %1312 = vmatprep.subr.mxu0 0.0
      %1313 = vmatpush1.msra.mxu0 0.0
      %1314 = vmatprep.subr.mxu0 0.0
      %1315 = vmatpush1.msra.mxu0 0.0
      %1316 = vmatprep.subr.mxu0 0.0
      %1317 = vmatpush1.msra.mxu0 0.0
      %1318 = vmatprep.subr.mxu0 0.0
      %1319 = vmatpush1.msra.mxu0 0.0
      %1320 = vmatprep.subr.mxu0 0.0
      %1321 = vmatpush1.msra.mxu0 0.0
      %1322 = vmatprep.subr.mxu0 0.0
      %1323 = vmatpush1.msra.mxu0 0.0
      %1324 = vmatprep.subr.mxu0 0.0
      %1325 = vmatpush1.msra.mxu0 0.0
      %1326 = vmatprep.subr.mxu0 0.0
      %1327 = vmatpush1.msra.mxu0 0.0
      %1328 = vmatprep.subr.mxu0 0.0
      %1329 = vmatpush1.msra.mxu0 0.0
      %1330 = vmatprep.subr.mxu0 0.0
      %1331 = vmatpush1.msra.mxu0 0.0
      %1332 = vmatprep.subr.mxu0 0.0
      %1333 = vmatpush1.msra.mxu0 0.0
      %1334 = vmatprep.subr.mxu0 0.0
      %1335 = vmatpush1.msra.mxu0 0.0
      %1336 = vmatprep.subr.mxu0 0.0
      %1337 = vmatpush1.msra.mxu0 0.0
      %1338 = vmatprep.subr.mxu0 0.0
      %1339 = vmatpush1.msra.mxu0 0.0
      %1340 = vmatprep.subr.mxu0 0.0
      %1341 = vmatpush1.msra.mxu0 0.0
      %1342 = vmatprep.subr.mxu0 0.0
      %1343 = vmatpush1.msra.mxu0 0.0
      %1344 = vmatprep.subr.mxu0 0.0
      %1345 = vmatpush1.msra.mxu0 0.0
      %1346 = vmatprep.subr.mxu0 0.0
      %1347 = vmatpush1.msra.mxu0 0.0
      %1348 = vmatprep.subr.mxu0 0.0
      %1349 = vmatpush1.msra.mxu0 0.0
      %1350 = vmatprep.subr.mxu0 0.0
      %1351 = vmatpush1.msra.mxu0 0.0
      %1352 = vmatprep.subr.mxu0 0.0
      %1353 = vmatpush1.msra.mxu0 0.0
      %1354 = vmatprep.subr.mxu0 0.0
      %1355 = vmatpush1.msra.mxu0 0.0
      %1356 = vmatprep.subr.mxu0 0.0
      %1357 = vmatpush1.msra.mxu0 0.0
      %1358 = vmatprep.subr.mxu0 0.0
      %1359 = vmatpush1.msra.mxu0 0.0
      %1360 = vmatprep.subr.mxu0 0.0
      %1361 = vmatpush1.msra.mxu0 0.0
      %1362 = vmatprep.subr.mxu0 0.0
      %1363 = vmatpush1.msra.mxu0 0.0
      %1364 = vmatprep.subr.mxu0 0.0
      %1365 = vmatpush1.msra.mxu0 0.0
      %1366 = vmatprep.subr.mxu0 0.0
      %1367 = vmatpush1.msra.mxu0 0.0
      %1368 = vmatprep.subr.mxu0 0.0
      %1369 = vmatpush1.msra.mxu0 0.0
      %1370 = vmatprep.subr.mxu0 0.0
      %1371 = vmatpush1.msra.mxu0 0.0
      %1372 = vmatprep.mubr.f32.mxu0 0.0
      %1373 = vmatmul.mubr.f32.gmra.mrb[0].mxu0 %v1306
      %v1374 = vpop.f32.mrb[0].mxu0
      %v1375 = vadd.f32 0.0, %v1374
      %v1376 = vpop.f32.mrb[0].mxu0
      %1377 = vdwg.mxu0
      %1379 = vrot.lane.b32.xlu0 %v1227, 8
      %v1380 = vpop.permute.xlu0 %1379
      %1383 = vrot.lane.b32.xlu0 %v1301, 16
      %v1384 = vpop.permute.xlu0 %1383
      %1387 = vrot.lane.b32.xlu0 %v1375, 24
      %v1388 = vpop.permute.xlu0 %1387
      %vm1390 = vcmask 64512
      %v1391 = vsel %vm1390, %v1153, %v1380
      %v1392 = vsel %vm473, %v1391, %v1384
      %vm1393 = vcmask 195584
      %v1394 = vsel %vm1393, %v1392, %v1388
      %v1395 = vld [vmem:[%s274] sm:$0xff]
      %v1396 = vadd.f32 %v1394, %v1395
      %1397 = vst.msk [vmem:[%s278] sm:$0xff] %vm312, %v1396
      %p1398 = scmp.lt.s32.totalorder %s29, 1
      %s1399 = scalar_select %p1398, %s29, 1
      %s1400 = smul.addr %s1399, 8
      %s1401 = scalar_lea.vmem %s8, %s1400
      // Predicated region
      $region45: #{_level_forward.1} parent=43 // pred_check
        %p1402 = pneg %p183
      $region46: #{_level_forward.1} parent=43 // pred_check_branch
        %1404 = sbr.rel (%p1402) target = $region48
      $region47: #{_level_forward.1} parent=43 // pred_region
        _
      $region48: #{_level_forward.1} parent=43 // pred_fallthru
        _
    $region44: #{_level_forward.1} parent=5 // pred_fallthru
      _
    %p1405 = scmp.le.s32.totalorder 2, %s24
    // Predicated region
    $region49: #{_level_forward.1} parent=5 // pred_check
      %p1406 = pneg %p1405
    $region50: #{_level_forward.1} parent=5 // pred_check_branch
      %1408 = sbr.rel (%p1406) target = $region52
    $region51: #{_level_forward.1} parent=5 // pred_region
      %s1409 = ssub.s32 %s24, 2
      // Predicated region
      $region53: #{_level_forward.1} parent=51 // pred_check
        %p1410 = pneg %p189
      $region54: #{_level_forward.1} parent=51 // pred_check_branch
        %1412 = sbr.rel (%p1410) target = $region56
      $region55: #{_level_forward.1} parent=51 // pred_region
        %p1413 = scmp.lt.s32.totalorder %s30, 1
        %s1414 = scalar_select %p1413, %s30, 1
        %s1415 = smul.addr %s1414, 8
        %s1416 = scalar_lea.vmem %s8, %s1415
      $region56: #{_level_forward.1} parent=51 // pred_fallthru
        _
    $region52: #{_level_forward.1} parent=5 // pred_fallthru
      _
  $region6: #{_level_forward.1} parent=0 // loop_footer
    %s28 = sadd.s32 1, %s24
  $region7: #{_level_forward.1} parent=0 // loop_footer_branch
    %23 = sbr.rel target = $region3
  $region8: #{_level_forward.1} parent=0 // loop_exit
    _

</llo_original>
